<compile_context>
chip_gen: v7x
topology: tpu7x:2x2x1
jax: 0.10.0
libtpu: 0.0.40
codegen_flags: <defaults>
</compile_context>

<pallas_src>
import functools
import math

import jax
import jax.numpy as jnp
from jax import lax
from jax.experimental import pallas as pl
from jax.experimental.pallas import tpu as pltpu


# ----------------------------------------------------------------------------
# model config (tiny synthetic stand-in for internlm2-1_8b)
# ----------------------------------------------------------------------------
VOCAB = 64
D_MODEL = 32
N_LAYERS = 2
N_HEADS = 2
HEAD_DIM = D_MODEL // N_HEADS
HD = N_HEADS * HEAD_DIM            # total attention width
D_FF = 64
RMS_EPS = 1e-5
NEG_INF = -1e30
IGNORE_INDEX = -100


# ----------------------------------------------------------------------------
# helpers
# ----------------------------------------------------------------------------
def _fs(shape):
    """Full-array block spec for a grid=(1,) call."""
    nd = len(shape)
    return pl.BlockSpec(shape, lambda i, _nd=nd: (0,) * _nd)


def _rmsnorm(x, w):
    var = jnp.mean(x * x, axis=-1, keepdims=True)
    return x * lax.rsqrt(var + RMS_EPS) * w


# ----------------------------------------------------------------------------
# fused decoder-layer kernel
# ----------------------------------------------------------------------------
def _layer_kernel(x_ref, attn_w_ref, wqkv_ref, wo_ref, ffn_w_ref, w13_ref,
                  w2_ref, cos_ref, sin_ref, rot_ref, bias_ref, o_ref):
    f32 = jnp.float32
    bf16 = jnp.bfloat16

    x = x_ref[...]                                        # [BS, D] f32 residual

    # ---------------- attention block ----------------
    h = _rmsnorm(x, attn_w_ref[...])
    qkv = jnp.dot(h.astype(bf16), wqkv_ref[...],
                  preferred_element_type=f32)             # [BS, 3*HD]
    q = qkv[:, 0 * HD:1 * HD]
    k = qkv[:, 1 * HD:2 * HD]
    v = qkv[:, 2 * HD:3 * HD]

    # RoPE: rotate_half(x) == x @ R (signed permutation), keeps f32 precision
    cos = cos_ref[...]
    sin = sin_ref[...]
    rot = rot_ref[...]
    q = q * cos + jnp.dot(q, rot, preferred_element_type=f32) * sin
    k = k * cos + jnp.dot(k, rot, preferred_element_type=f32) * sin

    bias = bias_ref[...]                                  # [BS, BS] additive mask
    wo = wo_ref[...]                                      # [HD, D] bf16
    scale = 1.0 / math.sqrt(HEAD_DIM)

    attn_proj = jnp.zeros_like(x)                         # accumulate through wo
    for hh in range(N_HEADS):
        lo, hi = hh * HEAD_DIM, (hh + 1) * HEAD_DIM
        qh = q[:, lo:hi].astype(bf16)
        kh = k[:, lo:hi].astype(bf16)
        vh = v[:, lo:hi].astype(bf16)
        # scores over all B*S rows at once; cross-batch + non-causal entries
        # are removed by the additive bias.
        s = lax.dot_general(qh, kh, (((1,), (1,)), ((), ())),
                            preferred_element_type=f32) * scale + bias
        m = jnp.max(s, axis=-1, keepdims=True)
        p = jnp.exp(s - m)
        p = p * pl.reciprocal(jnp.sum(p, axis=-1, keepdims=True), approx=True)
        oh = jnp.dot(p.astype(bf16), vh, preferred_element_type=f32)  # [BS, Dh]
        attn_proj = attn_proj + jnp.dot(oh.astype(bf16), wo[lo:hi, :],
                                        preferred_element_type=f32)
    x = x + attn_proj

    # ---------------- MLP (SwiGLU) block ----------------
    h2 = _rmsnorm(x, ffn_w_ref[...]).astype(bf16)
    gu = jnp.dot(h2, w13_ref[...], preferred_element_type=f32)       # [BS, 2*F]
    g = gu[:, :D_FF]
    u = gu[:, D_FF:]
    a = g * (1.0 / (1.0 + jnp.exp(-g))) * u                          # silu(g)*u
    x = x + jnp.dot(a.astype(bf16), w2_ref[...], preferred_element_type=f32)

    o_ref[...] = x


def fused_layer(x, layer, cos_t, sin_t, rot, bias):
    BS, D = x.shape
    return pl.pallas_call(
        _layer_kernel,
        out_shape=jax.ShapeDtypeStruct((BS, D), jnp.float32),
        grid=(1,),
        in_specs=[_fs((BS, D)), _fs((1, D)), _fs(layer["wqkv"].shape),
                  _fs(layer["wo"].shape), _fs((1, D)), _fs(layer["w13"].shape),
                  _fs(layer["w2"].shape), _fs(cos_t.shape), _fs(sin_t.shape),
                  _fs(rot.shape), _fs(bias.shape)],
        out_specs=_fs((BS, D)),
        input_output_aliases={0: 0},     # residual stream updated in place
        compiler_params=pltpu.CompilerParams(
            dimension_semantics=("arbitrary",)),
    )(x, layer["attn_norm"].reshape(1, -1), layer["wqkv"], layer["wo"],
      layer["ffn_norm"].reshape(1, -1), layer["w13"], layer["w2"],
      cos_t, sin_t, rot, bias)


# ----------------------------------------------------------------------------
# fused final-norm + LM head + cross-entropy kernel
# ----------------------------------------------------------------------------
def _head_kernel(x_ref, norm_w_ref, wout_ref, labels_ref, logits_ref, loss_ref):
    f32 = jnp.float32
    x = x_ref[...]
    h = _rmsnorm(x, norm_w_ref[...])
    logits = jnp.dot(h.astype(jnp.bfloat16), wout_ref[...],
                     preferred_element_type=f32)                      # [BS, V]
    logits_ref[...] = logits

    labels = labels_ref[...]                                          # [BS, 1]
    m = jnp.max(logits, axis=-1, keepdims=True)
    lse = jnp.log(jnp.sum(jnp.exp(logits - m), axis=-1, keepdims=True)) + m
    col = lax.broadcasted_iota(jnp.int32, logits.shape, 1)
    onehot = (col == labels).astype(f32)
    label_logit = jnp.sum(logits * onehot, axis=-1, keepdims=True)
    valid = (labels != IGNORE_INDEX).astype(f32)
    loss_ref[...] = (lse - label_logit) * valid                       # [BS, 1]


def fused_head(x, norm_w, w_out, shifted_labels):
    BS, D = x.shape
    V = w_out.shape[1]
    return pl.pallas_call(
        _head_kernel,
        out_shape=(jax.ShapeDtypeStruct((BS, V), jnp.float32),
                   jax.ShapeDtypeStruct((BS, 1), jnp.float32)),
        grid=(1,),
        in_specs=[_fs((BS, D)), _fs((1, D)), _fs((D, V)), _fs((BS, 1))],
        out_specs=(_fs((BS, V)), _fs((BS, 1))),
        compiler_params=pltpu.CompilerParams(
            dimension_semantics=("arbitrary",)),
    )(x, norm_w.reshape(1, -1), w_out, shifted_labels)


# ----------------------------------------------------------------------------
# parameters (synthetic, deterministic init — no checkpoint load)
# ----------------------------------------------------------------------------
def init_params(key):
    def nrm(k, shape, scale=0.02, dtype=jnp.bfloat16):
        return (scale * jax.random.normal(k, shape)).astype(dtype)

    keys = jax.random.split(key, 2 + N_LAYERS)
    params = {
        "tok_embeddings": nrm(keys[0], (VOCAB, D_MODEL), dtype=jnp.float32),
        "output": nrm(keys[1], (D_MODEL, VOCAB)),                 # bf16 LM head
        "final_norm": jnp.ones((D_MODEL,), jnp.float32),
        "layers": [],
    }
    for li in range(N_LAYERS):
        lk = jax.random.split(keys[2 + li], 7)
        wq = nrm(lk[0], (D_MODEL, HD))
        wk = nrm(lk[1], (D_MODEL, HD))
        wv = nrm(lk[2], (D_MODEL, HD))
        w1 = nrm(lk[4], (D_MODEL, D_FF))   # gate
        w3 = nrm(lk[5], (D_MODEL, D_FF))   # up
        params["layers"].append({
            "attn_norm": jnp.ones((D_MODEL,), jnp.float32),
            "wqkv": jnp.concatenate([wq, wk, wv], axis=1),        # [D, 3*HD]
            "wo": nrm(lk[3], (HD, D_MODEL)),
            "ffn_norm": jnp.ones((D_MODEL,), jnp.float32),
            "w13": jnp.concatenate([w1, w3], axis=1),             # [D, 2*F]
            "w2": nrm(lk[6], (D_FF, D_MODEL)),
        })
    return params


# ----------------------------------------------------------------------------
# RoPE tables / rotation matrix / attention bias (trace-time constants)
# ----------------------------------------------------------------------------
def rope_tables(seq_len, dim, theta=10000.0):
    inv_freq = 1.0 / (theta ** (jnp.arange(0, dim, 2, dtype=jnp.float32) / dim))
    pos = jnp.arange(seq_len, dtype=jnp.float32)
    freqs = pos[:, None] * inv_freq[None, :]
    emb = jnp.concatenate([freqs, freqs], axis=-1)                # [S, Dh]
    return jnp.cos(emb), jnp.sin(emb)


def rotate_half_matrix(n_heads, head_dim):
    """[HD, HD] signed permutation R so that x @ R == rotate_half(x) per head."""
    hd = n_heads * head_dim
    half = head_dim // 2
    rows = []
    for i in range(hd):
        h, li = divmod(i, head_dim)
        row = [0.0] * hd
        if li < half:
            row[h * head_dim + li + half] = 1.0     # x1 -> second half
        else:
            row[h * head_dim + li - half] = -1.0    # -x2 -> first half
        rows.append(row)
    return jnp.array(rows, dtype=jnp.float32)


def attention_bias(batch, seq):
    """[B*S, B*S] additive mask: 0 if same batch & causal, -inf otherwise."""
    idx = jnp.arange(batch * seq)
    bi = idx // seq
    pi = idx % seq
    allowed = (bi[:, None] == bi[None, :]) & (pi[None, :] <= pi[:, None])
    return jnp.where(allowed, 0.0, NEG_INF).astype(jnp.float32)


# ----------------------------------------------------------------------------
# forward pass (equivalent of LLMBackbone.forward(input_ids=..., labels=...))
# ----------------------------------------------------------------------------
def llm_backbone_forward(params, input_ids, labels):
    B, S = input_ids.shape
    BS = B * S

    # embedding gather (glue)
    x = jnp.take(params["tok_embeddings"], input_ids, axis=0).reshape(BS, D_MODEL)

    cos, sin = rope_tables(S, HEAD_DIM)                       # [S, Dh]
    cos_t = jnp.tile(jnp.tile(cos, (1, N_HEADS)), (B, 1))     # [BS, HD]
    sin_t = jnp.tile(jnp.tile(sin, (1, N_HEADS)), (B, 1))
    rot = rotate_half_matrix(N_HEADS, HEAD_DIM)               # [HD, HD]
    bias = attention_bias(B, S)                               # [BS, BS]

    for layer in params["layers"]:
        x = fused_layer(x, layer, cos_t, sin_t, rot, bias)

    # shifted labels (HF causal-LM semantics, ignore_index = -100):
    # position s is trained against label s+1; last position ignored.
    labels_i = labels.astype(jnp.int32)
    shifted = jnp.concatenate(
        [labels_i[:, 1:], jnp.full((B, 1), IGNORE_INDEX, jnp.int32)], axis=1
    ).reshape(BS, 1)

    logits2d, per_tok = fused_head(
        x, params["final_norm"], params["output"], shifted)
    logits = logits2d.reshape(B, S, VOCAB)

    valid = (shifted[:, 0] != IGNORE_INDEX).astype(jnp.float32)
    loss = jnp.sum(per_tok[:, 0]) / jnp.maximum(jnp.sum(valid), 1.0)
    return loss, logits


# TODO(synk): tokenizer, pretrained-weight loading, and the KV-cache
# `generate()` decode loop have no Pallas equivalent here; only the
# training-style forward (loss + logits) is implemented.


if __name__ == "__main__":
    key = jax.random.PRNGKey(0)
    pkey, ikey = jax.random.split(key)
    params = init_params(pkey)

    B, S = 2, 8
    input_ids = jax.random.randint(ikey, (B, S), 0, VOCAB, dtype=jnp.int32)
    labels = input_ids  # standard LM objective: labels == input_ids

    loss, logits = jax.jit(functools.partial(llm_backbone_forward, params))(
        input_ids, labels)
    jax.block_until_ready((loss, logits))
    assert logits.shape == (B, S, VOCAB)
    assert jnp.isfinite(loss)
    print("KERNEL_OK")
</pallas_src>

<mosaic_0001>
module attributes {stable_mosaic.version = 11 : i64} {
  func.func @_head_kernel(%arg0: i32, %arg1: memref<16x32xf32, #tpu.memory_space<vmem>>, %arg2: memref<1x32xf32, #tpu.memory_space<vmem>>, %arg3: memref<32x64xbf16, #tpu.memory_space<vmem>>, %arg4: memref<16x1xi32, #tpu.memory_space<vmem>>, %arg5: memref<16x64xf32, #tpu.memory_space<vmem>>, %arg6: memref<16x1xf32, #tpu.memory_space<vmem>>) attributes {dimension_semantics = [#tpu.dimension_semantics<arbitrary>], iteration_bounds = array<i64: 1>, scalar_prefetch = 0 : i64, scratch_operands = 0 : i64, tpu.core_type = #tpu.core_type<tc>, window_params = [{pipeline_mode = #tpu.pipeline_mode<synchronous>, transform_indices = @transform_0, window_bounds = array<i64: 16, 32>}, {pipeline_mode = #tpu.pipeline_mode<synchronous>, transform_indices = @transform_1, window_bounds = array<i64: 1, 32>}, {pipeline_mode = #tpu.pipeline_mode<synchronous>, transform_indices = @transform_2, window_bounds = array<i64: 32, 64>}, {pipeline_mode = #tpu.pipeline_mode<synchronous>, transform_indices = @transform_3, window_bounds = array<i64: 16, 1>}, {pipeline_mode = #tpu.pipeline_mode<synchronous>, transform_indices = @transform_4, window_bounds = array<i64: 16, 64>}, {pipeline_mode = #tpu.pipeline_mode<synchronous>, transform_indices = @transform_5, window_bounds = array<i64: 16, 1>}]} {
    %c0 = arith.constant 0 : index
    %c0_0 = arith.constant 0 : index
    %0 = vector.load %arg1[%c0, %c0_0] : memref<16x32xf32, #tpu.memory_space<vmem>>, vector<16x32xf32>
    %c0_1 = arith.constant 0 : index
    %c0_2 = arith.constant 0 : index
    %1 = vector.load %arg2[%c0_1, %c0_2] : memref<1x32xf32, #tpu.memory_space<vmem>>, vector<1x32xf32>
    %2 = arith.mulf %0, %0 : vector<16x32xf32>
    %cst = arith.constant dense<0.000000e+00> : vector<16xf32>
    %3 = vector.multi_reduction <add>, %2, %cst [1] : vector<16x32xf32> to vector<16xf32>
    %4 = vector.shape_cast %3 : vector<16xf32> to vector<16x1xf32>
    %cst_3 = arith.constant 3.200000e+01 : f32
    %5 = vector.broadcast %cst_3 : f32 to vector<16x1xf32>
    %6 = arith.divf %4, %5 : vector<16x1xf32>
    %cst_4 = arith.constant 9.99999974E-6 : f32
    %7 = vector.broadcast %cst_4 : f32 to vector<16x1xf32>
    %8 = arith.addf %6, %7 : vector<16x1xf32>
    %9 = math.rsqrt %8 : vector<16x1xf32>
    %10 = vector.broadcast %9 : vector<16x1xf32> to vector<16x32xf32>
    %11 = arith.mulf %0, %10 : vector<16x32xf32>
    %12 = vector.broadcast %1 : vector<1x32xf32> to vector<16x32xf32>
    %13 = arith.mulf %11, %12 : vector<16x32xf32>
    %14 = arith.truncf %13 : vector<16x32xf32> to vector<16x32xbf16>
    %c0_5 = arith.constant 0 : index
    %c0_6 = arith.constant 0 : index
    %15 = vector.load %arg3[%c0_5, %c0_6] : memref<32x64xbf16, #tpu.memory_space<vmem>>, vector<32x64xbf16>
    %cst_7 = arith.constant dense<0.000000e+00> : vector<16x64xf32>
    %16 = tpu.matmul %14, %15, %cst_7 {dimension_numbers = #tpu.dot_dimension_numbers<[1], [0], [0], [1], [0, 0, 1, 1], [], []>} : vector<16x32xbf16>, vector<32x64xbf16>, vector<16x64xf32> -> vector<16x64xf32>
    %c0_8 = arith.constant 0 : index
    %c0_9 = arith.constant 0 : index
    %17 = vector.load %arg5[%c0_8, %c0_9] : memref<16x64xf32, #tpu.memory_space<vmem>>, vector<16x64xf32>
    tpu.vector_store %arg5[%c0_8, %c0_9], %16 {strides = array<i32>} : memref<16x64xf32, #tpu.memory_space<vmem>>, vector<16x64xf32>,
    %c0_10 = arith.constant 0 : index
    %c0_11 = arith.constant 0 : index
    %18 = vector.load %arg4[%c0_10, %c0_11] : memref<16x1xi32, #tpu.memory_space<vmem>>, vector<16x1xi32>
    %cst_12 = arith.constant dense<0xFF800000> : vector<16xf32>
    %19 = vector.multi_reduction <maximumf>, %16, %cst_12 [1] : vector<16x64xf32> to vector<16xf32>
    %20 = vector.shape_cast %19 : vector<16xf32> to vector<16x1xf32>
    %21 = vector.broadcast %20 : vector<16x1xf32> to vector<16x64xf32>
    %22 = arith.subf %16, %21 : vector<16x64xf32>
    %23 = math.exp %22 : vector<16x64xf32>
    %cst_13 = arith.constant dense<0.000000e+00> : vector<16xf32>
    %24 = vector.multi_reduction <add>, %23, %cst_13 [1] : vector<16x64xf32> to vector<16xf32>
    %25 = vector.shape_cast %24 : vector<16xf32> to vector<16x1xf32>
    %26 = math.log %25 : vector<16x1xf32>
    %27 = arith.addf %26, %20 : vector<16x1xf32>
    %28 = tpu.iota {dimensions = array<i32: 1>} : vector<16x64xi32>
    %29 = vector.broadcast %18 : vector<16x1xi32> to vector<16x64xi32>
    %30 = arith.cmpi eq, %28, %29 : vector<16x64xi32>
    %31 = arith.extui %30 : vector<16x64xi1> to vector<16x64xi32>
    %32 = arith.sitofp %31 : vector<16x64xi32> to vector<16x64xf32>
    %33 = arith.mulf %16, %32 : vector<16x64xf32>
    %cst_14 = arith.constant dense<0.000000e+00> : vector<16xf32>
    %34 = vector.multi_reduction <add>, %33, %cst_14 [1] : vector<16x64xf32> to vector<16xf32>
    %35 = vector.shape_cast %34 : vector<16xf32> to vector<16x1xf32>
    %c-100_i32 = arith.constant -100 : i32
    %36 = vector.broadcast %c-100_i32 : i32 to vector<16x1xi32>
    %37 = arith.cmpi ne, %18, %36 : vector<16x1xi32>
    %38 = arith.extui %37 : vector<16x1xi1> to vector<16x1xi32>
    %39 = arith.sitofp %38 : vector<16x1xi32> to vector<16x1xf32>
    %40 = arith.subf %27, %35 : vector<16x1xf32>
    %41 = arith.mulf %40, %39 : vector<16x1xf32>
    %c0_15 = arith.constant 0 : index
    %c0_16 = arith.constant 0 : index
    %42 = vector.load %arg6[%c0_15, %c0_16] : memref<16x1xf32, #tpu.memory_space<vmem>>, vector<16x1xf32>
    tpu.vector_store %arg6[%c0_15, %c0_16], %41 {strides = array<i32>} : memref<16x1xf32, #tpu.memory_space<vmem>>, vector<16x1xf32>,
    return
  }
  func.func @transform_0(%arg0: i32) -> (i32, i32) {
    %c0_i32 = arith.constant 0 : i32
    %c0_i32_0 = arith.constant 0 : i32
    %c0_i32_1 = arith.constant 0 : i32
    return %c0_i32, %c0_i32_0 : i32, i32
  }
  func.func @transform_1(%arg0: i32) -> (i32, i32) {
    %c0_i32 = arith.constant 0 : i32
    %c0_i32_0 = arith.constant 0 : i32
    %c0_i32_1 = arith.constant 0 : i32
    return %c0_i32, %c0_i32_0 : i32, i32
  }
  func.func @transform_2(%arg0: i32) -> (i32, i32) {
    %c0_i32 = arith.constant 0 : i32
    %c0_i32_0 = arith.constant 0 : i32
    %c0_i32_1 = arith.constant 0 : i32
    return %c0_i32, %c0_i32_0 : i32, i32
  }
  func.func @transform_3(%arg0: i32) -> (i32, i32) {
    %c0_i32 = arith.constant 0 : i32
    %c0_i32_0 = arith.constant 0 : i32
    %c0_i32_1 = arith.constant 0 : i32
    return %c0_i32, %c0_i32_0 : i32, i32
  }
  func.func @transform_4(%arg0: i32) -> (i32, i32) {
    %c0_i32 = arith.constant 0 : i32
    %c0_i32_0 = arith.constant 0 : i32
    %c0_i32_1 = arith.constant 0 : i32
    return %c0_i32, %c0_i32_0 : i32, i32
  }
  func.func @transform_5(%arg0: i32) -> (i32, i32) {
    %c0_i32 = arith.constant 0 : i32
    %c0_i32_0 = arith.constant 0 : i32
    %c0_i32_1 = arith.constant 0 : i32
    return %c0_i32, %c0_i32_0 : i32, i32
  }
}

module attributes {stable_mosaic.version = 11 : i64} {
  func.func @_layer_kernel(%arg0: i32, %arg1: memref<16x32xf32, #tpu.memory_space<vmem>>, %arg2: memref<1x32xf32, #tpu.memory_space<vmem>>, %arg3: memref<32x96xbf16, #tpu.memory_space<vmem>>, %arg4: memref<32x32xbf16, #tpu.memory_space<vmem>>, %arg5: memref<1x32xf32, #tpu.memory_space<vmem>>, %arg6: memref<32x128xbf16, #tpu.memory_space<vmem>>, %arg7: memref<64x32xbf16, #tpu.memory_space<vmem>>, %arg8: memref<16x32xf32, #tpu.memory_space<vmem>>, %arg9: memref<16x32xf32, #tpu.memory_space<vmem>>, %arg10: memref<32x32xf32, #tpu.memory_space<vmem>>, %arg11: memref<16x16xf32, #tpu.memory_space<vmem>>, %arg12: memref<16x32xf32, #tpu.memory_space<vmem>>) attributes {dimension_semantics = [#tpu.dimension_semantics<arbitrary>], iteration_bounds = array<i64: 1>, scalar_prefetch = 0 : i64, scratch_operands = 0 : i64, tpu.core_type = #tpu.core_type<tc>, window_params = [{pipeline_mode = #tpu.pipeline_mode<synchronous>, transform_indices = @transform_0, window_bounds = array<i64: 16, 32>}, {pipeline_mode = #tpu.pipeline_mode<synchronous>, transform_indices = @transform_1, window_bounds = array<i64: 1, 32>}, {pipeline_mode = #tpu.pipeline_mode<synchronous>, transform_indices = @transform_2, window_bounds = array<i64: 32, 96>}, {pipeline_mode = #tpu.pipeline_mode<synchronous>, transform_indices = @transform_3, window_bounds = array<i64: 32, 32>}, {pipeline_mode = #tpu.pipeline_mode<synchronous>, transform_indices = @transform_4, window_bounds = array<i64: 1, 32>}, {pipeline_mode = #tpu.pipeline_mode<synchronous>, transform_indices = @transform_5, window_bounds = array<i64: 32, 128>}, {pipeline_mode = #tpu.pipeline_mode<synchronous>, transform_indices = @transform_6, window_bounds = array<i64: 64, 32>}, {pipeline_mode = #tpu.pipeline_mode<synchronous>, transform_indices = @transform_7, window_bounds = array<i64: 16, 32>}, {pipeline_mode = #tpu.pipeline_mode<synchronous>, transform_indices = @transform_8, window_bounds = array<i64: 16, 32>}, {pipeline_mode = #tpu.pipeline_mode<synchronous>, transform_indices = @transform_9, window_bounds = array<i64: 32, 32>}, {pipeline_mode = #tpu.pipeline_mode<synchronous>, transform_indices = @transform_10, window_bounds = array<i64: 16, 16>}, {pipeline_mode = #tpu.pipeline_mode<synchronous>, transform_indices = @transform_11, window_bounds = array<i64: 16, 32>}]} {
    %c0 = arith.constant 0 : index
    %c0_0 = arith.constant 0 : index
    %0 = vector.load %arg1[%c0, %c0_0] : memref<16x32xf32, #tpu.memory_space<vmem>>, vector<16x32xf32>
    %c0_1 = arith.constant 0 : index
    %c0_2 = arith.constant 0 : index
    %1 = vector.load %arg2[%c0_1, %c0_2] : memref<1x32xf32, #tpu.memory_space<vmem>>, vector<1x32xf32>
    %2 = arith.mulf %0, %0 : vector<16x32xf32>
    %cst = arith.constant dense<0.000000e+00> : vector<16xf32>
    %3 = vector.multi_reduction <add>, %2, %cst [1] : vector<16x32xf32> to vector<16xf32>
    %4 = vector.shape_cast %3 : vector<16xf32> to vector<16x1xf32>
    %cst_3 = arith.constant 3.200000e+01 : f32
    %5 = vector.broadcast %cst_3 : f32 to vector<16x1xf32>
    %6 = arith.divf %4, %5 : vector<16x1xf32>
    %cst_4 = arith.constant 9.99999974E-6 : f32
    %7 = vector.broadcast %cst_4 : f32 to vector<16x1xf32>
    %8 = arith.addf %6, %7 : vector<16x1xf32>
    %9 = math.rsqrt %8 : vector<16x1xf32>
    %10 = vector.broadcast %9 : vector<16x1xf32> to vector<16x32xf32>
    %11 = arith.mulf %0, %10 : vector<16x32xf32>
    %12 = vector.broadcast %1 : vector<1x32xf32> to vector<16x32xf32>
    %13 = arith.mulf %11, %12 : vector<16x32xf32>
    %14 = arith.truncf %13 : vector<16x32xf32> to vector<16x32xbf16>
    %c0_5 = arith.constant 0 : index
    %c0_6 = arith.constant 0 : index
    %15 = vector.load %arg3[%c0_5, %c0_6] : memref<32x96xbf16, #tpu.memory_space<vmem>>, vector<32x96xbf16>
    %cst_7 = arith.constant dense<0.000000e+00> : vector<16x96xf32>
    %16 = tpu.matmul %14, %15, %cst_7 {dimension_numbers = #tpu.dot_dimension_numbers<[1], [0], [0], [1], [0, 0, 1, 1], [], []>} : vector<16x32xbf16>, vector<32x96xbf16>, vector<16x96xf32> -> vector<16x96xf32>
    %17 = vector.extract_strided_slice %16 {offsets = [0, 0], sizes = [16, 32], strides = [1, 1]} : vector<16x96xf32> to vector<16x32xf32>
    %18 = vector.extract_strided_slice %16 {offsets = [0, 32], sizes = [16, 32], strides = [1, 1]} : vector<16x96xf32> to vector<16x32xf32>
    %19 = vector.extract_strided_slice %16 {offsets = [0, 64], sizes = [16, 32], strides = [1, 1]} : vector<16x96xf32> to vector<16x32xf32>
    %c0_8 = arith.constant 0 : index
    %c0_9 = arith.constant 0 : index
    %20 = vector.load %arg8[%c0_8, %c0_9] : memref<16x32xf32, #tpu.memory_space<vmem>>, vector<16x32xf32>
    %c0_10 = arith.constant 0 : index
    %c0_11 = arith.constant 0 : index
    %21 = vector.load %arg9[%c0_10, %c0_11] : memref<16x32xf32, #tpu.memory_space<vmem>>, vector<16x32xf32>
    %c0_12 = arith.constant 0 : index
    %c0_13 = arith.constant 0 : index
    %22 = vector.load %arg10[%c0_12, %c0_13] : memref<32x32xf32, #tpu.memory_space<vmem>>, vector<32x32xf32>
    %23 = arith.mulf %17, %20 : vector<16x32xf32>
    %cst_14 = arith.constant dense<0.000000e+00> : vector<16x32xf32>
    %24 = tpu.matmul %17, %22, %cst_14 {dimension_numbers = #tpu.dot_dimension_numbers<[1], [0], [0], [1], [0, 0, 1, 1], [], []>} : vector<16x32xf32>, vector<32x32xf32>, vector<16x32xf32> -> vector<16x32xf32>
    %25 = arith.mulf %24, %21 : vector<16x32xf32>
    %26 = arith.addf %23, %25 : vector<16x32xf32>
    %27 = arith.mulf %18, %20 : vector<16x32xf32>
    %cst_15 = arith.constant dense<0.000000e+00> : vector<16x32xf32>
    %28 = tpu.matmul %18, %22, %cst_15 {dimension_numbers = #tpu.dot_dimension_numbers<[1], [0], [0], [1], [0, 0, 1, 1], [], []>} : vector<16x32xf32>, vector<32x32xf32>, vector<16x32xf32> -> vector<16x32xf32>
    %29 = arith.mulf %28, %21 : vector<16x32xf32>
    %30 = arith.addf %27, %29 : vector<16x32xf32>
    %c0_16 = arith.constant 0 : index
    %c0_17 = arith.constant 0 : index
    %31 = vector.load %arg11[%c0_16, %c0_17] : memref<16x16xf32, #tpu.memory_space<vmem>>, vector<16x16xf32>
    %c0_18 = arith.constant 0 : index
    %c0_19 = arith.constant 0 : index
    %32 = vector.load %arg4[%c0_18, %c0_19] : memref<32x32xbf16, #tpu.memory_space<vmem>>, vector<32x32xbf16>
    %cst_20 = arith.constant 0.000000e+00 : f32
    %33 = vector.broadcast %cst_20 : f32 to vector<16x32xf32>
    %34 = vector.extract_strided_slice %26 {offsets = [0, 0], sizes = [16, 16], strides = [1, 1]} : vector<16x32xf32> to vector<16x16xf32>
    %35 = arith.truncf %34 : vector<16x16xf32> to vector<16x16xbf16>
    %36 = vector.extract_strided_slice %30 {offsets = [0, 0], sizes = [16, 16], strides = [1, 1]} : vector<16x32xf32> to vector<16x16xf32>
    %37 = arith.truncf %36 : vector<16x16xf32> to vector<16x16xbf16>
    %38 = vector.extract_strided_slice %19 {offsets = [0, 0], sizes = [16, 16], strides = [1, 1]} : vector<16x32xf32> to vector<16x16xf32>
    %39 = arith.truncf %38 : vector<16x16xf32> to vector<16x16xbf16>
    %cst_21 = arith.constant dense<0.000000e+00> : vector<16x16xf32>
    %40 = tpu.matmul %35, %37, %cst_21 {dimension_numbers = #tpu.dot_dimension_numbers<[1], [1], [0], [0], [0, 0, 1, 0], [], []>} : vector<16x16xbf16>, vector<16x16xbf16>, vector<16x16xf32> -> vector<16x16xf32>
    %cst_22 = arith.constant 2.500000e-01 : f32
    %41 = vector.broadcast %cst_22 : f32 to vector<16x16xf32>
    %42 = arith.mulf %40, %41 : vector<16x16xf32>
    %43 = arith.addf %42, %31 : vector<16x16xf32>
    %cst_23 = arith.constant dense<0xFF800000> : vector<16xf32>
    %44 = vector.multi_reduction <maximumf>, %43, %cst_23 [1] : vector<16x16xf32> to vector<16xf32>
    %45 = vector.shape_cast %44 : vector<16xf32> to vector<16x1xf32>
    %46 = vector.broadcast %45 : vector<16x1xf32> to vector<16x16xf32>
    %47 = arith.subf %43, %46 : vector<16x16xf32>
    %48 = math.exp %47 : vector<16x16xf32>
    %cst_24 = arith.constant dense<0.000000e+00> : vector<16xf32>
    %49 = vector.multi_reduction <add>, %48, %cst_24 [1] : vector<16x16xf32> to vector<16xf32>
    %50 = vector.shape_cast %49 : vector<16xf32> to vector<16x1xf32>
    %51 = tpu.reciprocal %50 {approx = true} : vector<16x1xf32> -> vector<16x1xf32>
    %52 = vector.broadcast %51 : vector<16x1xf32> to vector<16x16xf32>
    %53 = arith.mulf %48, %52 : vector<16x16xf32>
    %54 = arith.truncf %53 : vector<16x16xf32> to vector<16x16xbf16>
    %cst_25 = arith.constant dense<0.000000e+00> : vector<16x16xf32>
    %55 = tpu.matmul %54, %39, %cst_25 {dimension_numbers = #tpu.dot_dimension_numbers<[1], [0], [0], [1], [0, 0, 1, 1], [], []>} : vector<16x16xbf16>, vector<16x16xbf16>, vector<16x16xf32> -> vector<16x16xf32>
    %56 = arith.truncf %55 : vector<16x16xf32> to vector<16x16xbf16>
    %57 = vector.extract_strided_slice %32 {offsets = [0, 0], sizes = [16, 32], strides = [1, 1]} : vector<32x32xbf16> to vector<16x32xbf16>
    %cst_26 = arith.constant dense<0.000000e+00> : vector<16x32xf32>
    %58 = tpu.matmul %56, %57, %cst_26 {dimension_numbers = #tpu.dot_dimension_numbers<[1], [0], [0], [1], [0, 0, 1, 1], [], []>} : vector<16x16xbf16>, vector<16x32xbf16>, vector<16x32xf32> -> vector<16x32xf32>
    %59 = arith.addf %33, %58 : vector<16x32xf32>
    %60 = vector.extract_strided_slice %26 {offsets = [0, 16], sizes = [16, 16], strides = [1, 1]} : vector<16x32xf32> to vector<16x16xf32>
    %61 = arith.truncf %60 : vector<16x16xf32> to vector<16x16xbf16>
    %62 = vector.extract_strided_slice %30 {offsets = [0, 16], sizes = [16, 16], strides = [1, 1]} : vector<16x32xf32> to vector<16x16xf32>
    %63 = arith.truncf %62 : vector<16x16xf32> to vector<16x16xbf16>
    %64 = vector.extract_strided_slice %19 {offsets = [0, 16], sizes = [16, 16], strides = [1, 1]} : vector<16x32xf32> to vector<16x16xf32>
    %65 = arith.truncf %64 : vector<16x16xf32> to vector<16x16xbf16>
    %cst_27 = arith.constant dense<0.000000e+00> : vector<16x16xf32>
    %66 = tpu.matmul %61, %63, %cst_27 {dimension_numbers = #tpu.dot_dimension_numbers<[1], [1], [0], [0], [0, 0, 1, 0], [], []>} : vector<16x16xbf16>, vector<16x16xbf16>, vector<16x16xf32> -> vector<16x16xf32>
    %cst_28 = arith.constant 2.500000e-01 : f32
    %67 = vector.broadcast %cst_28 : f32 to vector<16x16xf32>
    %68 = arith.mulf %66, %67 : vector<16x16xf32>
    %69 = arith.addf %68, %31 : vector<16x16xf32>
    %cst_29 = arith.constant dense<0xFF800000> : vector<16xf32>
    %70 = vector.multi_reduction <maximumf>, %69, %cst_29 [1] : vector<16x16xf32> to vector<16xf32>
    %71 = vector.shape_cast %70 : vector<16xf32> to vector<16x1xf32>
    %72 = vector.broadcast %71 : vector<16x1xf32> to vector<16x16xf32>
    %73 = arith.subf %69, %72 : vector<16x16xf32>
    %74 = math.exp %73 : vector<16x16xf32>
    %cst_30 = arith.constant dense<0.000000e+00> : vector<16xf32>
    %75 = vector.multi_reduction <add>, %74, %cst_30 [1] : vector<16x16xf32> to vector<16xf32>
    %76 = vector.shape_cast %75 : vector<16xf32> to vector<16x1xf32>
    %77 = tpu.reciprocal %76 {approx = true} : vector<16x1xf32> -> vector<16x1xf32>
    %78 = vector.broadcast %77 : vector<16x1xf32> to vector<16x16xf32>
    %79 = arith.mulf %74, %78 : vector<16x16xf32>
    %80 = arith.truncf %79 : vector<16x16xf32> to vector<16x16xbf16>
    %cst_31 = arith.constant dense<0.000000e+00> : vector<16x16xf32>
    %81 = tpu.matmul %80, %65, %cst_31 {dimension_numbers = #tpu.dot_dimension_numbers<[1], [0], [0], [1], [0, 0, 1, 1], [], []>} : vector<16x16xbf16>, vector<16x16xbf16>, vector<16x16xf32> -> vector<16x16xf32>
    %82 = arith.truncf %81 : vector<16x16xf32> to vector<16x16xbf16>
    %83 = vector.extract_strided_slice %32 {offsets = [16, 0], sizes = [16, 32], strides = [1, 1]} : vector<32x32xbf16> to vector<16x32xbf16>
    %cst_32 = arith.constant dense<0.000000e+00> : vector<16x32xf32>
    %84 = tpu.matmul %82, %83, %cst_32 {dimension_numbers = #tpu.dot_dimension_numbers<[1], [0], [0], [1], [0, 0, 1, 1], [], []>} : vector<16x16xbf16>, vector<16x32xbf16>, vector<16x32xf32> -> vector<16x32xf32>
    %85 = arith.addf %59, %84 : vector<16x32xf32>
    %86 = arith.addf %0, %85 : vector<16x32xf32>
    %c0_33 = arith.constant 0 : index
    %c0_34 = arith.constant 0 : index
    %87 = vector.load %arg5[%c0_33, %c0_34] : memref<1x32xf32, #tpu.memory_space<vmem>>, vector<1x32xf32>
    %88 = arith.mulf %86, %86 : vector<16x32xf32>
    %cst_35 = arith.constant dense<0.000000e+00> : vector<16xf32>
    %89 = vector.multi_reduction <add>, %88, %cst_35 [1] : vector<16x32xf32> to vector<16xf32>
    %90 = vector.shape_cast %89 : vector<16xf32> to vector<16x1xf32>
    %cst_36 = arith.constant 3.200000e+01 : f32
    %91 = vector.broadcast %cst_36 : f32 to vector<16x1xf32>
    %92 = arith.divf %90, %91 : vector<16x1xf32>
    %cst_37 = arith.constant 9.99999974E-6 : f32
    %93 = vector.broadcast %cst_37 : f32 to vector<16x1xf32>
    %94 = arith.addf %92, %93 : vector<16x1xf32>
    %95 = math.rsqrt %94 : vector<16x1xf32>
    %96 = vector.broadcast %95 : vector<16x1xf32> to vector<16x32xf32>
    %97 = arith.mulf %86, %96 : vector<16x32xf32>
    %98 = vector.broadcast %87 : vector<1x32xf32> to vector<16x32xf32>
    %99 = arith.mulf %97, %98 : vector<16x32xf32>
    %100 = arith.truncf %99 : vector<16x32xf32> to vector<16x32xbf16>
    %c0_38 = arith.constant 0 : index
    %c0_39 = arith.constant 0 : index
    %101 = vector.load %arg6[%c0_38, %c0_39] : memref<32x128xbf16, #tpu.memory_space<vmem>>, vector<32x128xbf16>
    %cst_40 = arith.constant dense<0.000000e+00> : vector<16x128xf32>
    %102 = tpu.matmul %100, %101, %cst_40 {dimension_numbers = #tpu.dot_dimension_numbers<[1], [0], [0], [1], [0, 0, 1, 1], [], []>} : vector<16x32xbf16>, vector<32x128xbf16>, vector<16x128xf32> -> vector<16x128xf32>
    %103 = vector.extract_strided_slice %102 {offsets = [0, 0], sizes = [16, 64], strides = [1, 1]} : vector<16x128xf32> to vector<16x64xf32>
    %104 = vector.extract_strided_slice %102 {offsets = [0, 64], sizes = [16, 64], strides = [1, 1]} : vector<16x128xf32> to vector<16x64xf32>
    %cst_41 = arith.constant 0.000000e+00 : f32
    %105 = vector.broadcast %cst_41 : f32 to vector<16x64xf32>
    %106 = arith.subf %105, %103 : vector<16x64xf32>
    %107 = math.exp %106 : vector<16x64xf32>
    %cst_42 = arith.constant 1.000000e+00 : f32
    %108 = vector.broadcast %cst_42 : f32 to vector<16x64xf32>
    %109 = arith.addf %108, %107 : vector<16x64xf32>
    %cst_43 = arith.constant 1.000000e+00 : f32
    %110 = vector.broadcast %cst_43 : f32 to vector<16x64xf32>
    %111 = arith.divf %110, %109 : vector<16x64xf32>
    %112 = arith.mulf %103, %111 : vector<16x64xf32>
    %113 = arith.mulf %112, %104 : vector<16x64xf32>
    %114 = arith.truncf %113 : vector<16x64xf32> to vector<16x64xbf16>
    %c0_44 = arith.constant 0 : index
    %c0_45 = arith.constant 0 : index
    %115 = vector.load %arg7[%c0_44, %c0_45] : memref<64x32xbf16, #tpu.memory_space<vmem>>, vector<64x32xbf16>
    %cst_46 = arith.constant dense<0.000000e+00> : vector<16x32xf32>
    %116 = tpu.matmul %114, %115, %cst_46 {dimension_numbers = #tpu.dot_dimension_numbers<[1], [0], [0], [1], [0, 0, 1, 1], [], []>} : vector<16x64xbf16>, vector<64x32xbf16>, vector<16x32xf32> -> vector<16x32xf32>
    %117 = arith.addf %86, %116 : vector<16x32xf32>
    %c0_47 = arith.constant 0 : index
    %c0_48 = arith.constant 0 : index
    %118 = vector.load %arg12[%c0_47, %c0_48] : memref<16x32xf32, #tpu.memory_space<vmem>>, vector<16x32xf32>
    tpu.vector_store %arg12[%c0_47, %c0_48], %117 {strides = array<i32>} : memref<16x32xf32, #tpu.memory_space<vmem>>, vector<16x32xf32>,
    return
  }
  func.func @transform_0(%arg0: i32) -> (i32, i32) {
    %c0_i32 = arith.constant 0 : i32
    %c0_i32_0 = arith.constant 0 : i32
    %c0_i32_1 = arith.constant 0 : i32
    return %c0_i32, %c0_i32_0 : i32, i32
  }
  func.func @transform_1(%arg0: i32) -> (i32, i32) {
    %c0_i32 = arith.constant 0 : i32
    %c0_i32_0 = arith.constant 0 : i32
    %c0_i32_1 = arith.constant 0 : i32
    return %c0_i32, %c0_i32_0 : i32, i32
  }
  func.func @transform_2(%arg0: i32) -> (i32, i32) {
    %c0_i32 = arith.constant 0 : i32
    %c0_i32_0 = arith.constant 0 : i32
    %c0_i32_1 = arith.constant 0 : i32
    return %c0_i32, %c0_i32_0 : i32, i32
  }
  func.func @transform_3(%arg0: i32) -> (i32, i32) {
    %c0_i32 = arith.constant 0 : i32
    %c0_i32_0 = arith.constant 0 : i32
    %c0_i32_1 = arith.constant 0 : i32
    return %c0_i32, %c0_i32_0 : i32, i32
  }
  func.func @transform_4(%arg0: i32) -> (i32, i32) {
    %c0_i32 = arith.constant 0 : i32
    %c0_i32_0 = arith.constant 0 : i32
    %c0_i32_1 = arith.constant 0 : i32
    return %c0_i32, %c0_i32_0 : i32, i32
  }
  func.func @transform_5(%arg0: i32) -> (i32, i32) {
    %c0_i32 = arith.constant 0 : i32
    %c0_i32_0 = arith.constant 0 : i32
    %c0_i32_1 = arith.constant 0 : i32
    return %c0_i32, %c0_i32_0 : i32, i32
  }
  func.func @transform_6(%arg0: i32) -> (i32, i32) {
    %c0_i32 = arith.constant 0 : i32
    %c0_i32_0 = arith.constant 0 : i32
    %c0_i32_1 = arith.constant 0 : i32
    return %c0_i32, %c0_i32_0 : i32, i32
  }
  func.func @transform_7(%arg0: i32) -> (i32, i32) {
    %c0_i32 = arith.constant 0 : i32
    %c0_i32_0 = arith.constant 0 : i32
    %c0_i32_1 = arith.constant 0 : i32
    return %c0_i32, %c0_i32_0 : i32, i32
  }
  func.func @transform_8(%arg0: i32) -> (i32, i32) {
    %c0_i32 = arith.constant 0 : i32
    %c0_i32_0 = arith.constant 0 : i32
    %c0_i32_1 = arith.constant 0 : i32
    return %c0_i32, %c0_i32_0 : i32, i32
  }
  func.func @transform_9(%arg0: i32) -> (i32, i32) {
    %c0_i32 = arith.constant 0 : i32
    %c0_i32_0 = arith.constant 0 : i32
    %c0_i32_1 = arith.constant 0 : i32
    return %c0_i32, %c0_i32_0 : i32, i32
  }
  func.func @transform_10(%arg0: i32) -> (i32, i32) {
    %c0_i32 = arith.constant 0 : i32
    %c0_i32_0 = arith.constant 0 : i32
    %c0_i32_1 = arith.constant 0 : i32
    return %c0_i32, %c0_i32_0 : i32, i32
  }
  func.func @transform_11(%arg0: i32) -> (i32, i32) {
    %c0_i32 = arith.constant 0 : i32
    %c0_i32_0 = arith.constant 0 : i32
    %c0_i32_1 = arith.constant 0 : i32
    return %c0_i32, %c0_i32_0 : i32, i32
  }
}

</mosaic_0001>

<llo_original>
// kernel: llm_backbone_forward.5
$region0: #{llm_backbone_forward.5}
  #allocation0 [shape = 'u32[]', space=smem, size = 0x4, offset = 0x4, fixed_abs, tag = 'smem constant byte address 0x4 - core index']
  #allocation1 [shape = 'u32[144,128]{1,0:T(1,128)}', space=vmem, size = 0x12000, scoped, tag = 'internal scratch']
  %s0 = inlined_call_operand.vmem [shape: f32[16,32], index: 0, kind: input, shape index: {}]
  %s1 = inlined_call_operand.vmem [shape: f32[1,32], index: 1, kind: input, shape index: {}]
  %s2 = inlined_call_operand.vmem [shape: bf16[32,64], index: 2, kind: input, shape index: {}]
  %s3 = inlined_call_operand.vmem [shape: s32[16,1], index: 3, kind: input, shape index: {}]
  %s4 = inlined_call_operand.hbm [shape: f32[16,64], index: 4, kind: output, shape index: {0}]
  %s5 = inlined_call_operand.vmem [shape: f32[16,1], index: 5, kind: output, shape index: {1}]
  %6 = xla_tuple %s4, %s5
  %s7 = sld [smem:[#allocation0]]
  $region34: #{llm_backbone_forward.5} parent=0
    _
  %s9 = ssub.s32 1, %s7
  %s10 = scalar_select 0, %s9, %s7
  $region1: #{llm_backbone_forward.5} parent=0
    #allocation2 [shape = 'u8[8192]{0}', space=vmem, size = 0x2000, scoped, tag = 'output window, operand 0, single buffered']
    #allocation3 [shape = 's32[1]{0}', space=sflag, size = 0x4, scoped, tag = 'scoped memory for llm_backbone_forward.5']
    %11 = vsyncpa [#allocation3], 0
    // Predicated region
    $region2: #{llm_backbone_forward.5} parent=1 // pred_check
      _
    $region3: #{llm_backbone_forward.5} parent=1 // pred_check_branch
      %13 = sbr.rel (0) target = $region5
    $region4: #{llm_backbone_forward.5} parent=1 // pred_region
      _
    $region5: #{llm_backbone_forward.5} parent=1 // pred_fallthru
      _
    // Predicated region
    $region6: #{llm_backbone_forward.5} parent=1 // pred_check
      _
    $region7: #{llm_backbone_forward.5} parent=1 // pred_check_branch
      %15 = sbr.rel (0) target = $region9
    $region8: #{llm_backbone_forward.5} parent=1 // pred_region
      _
    $region9: #{llm_backbone_forward.5} parent=1 // pred_fallthru
      _
    // Predicated region
    $region10: #{llm_backbone_forward.5} parent=1 // pred_check
      _
    $region11: #{llm_backbone_forward.5} parent=1 // pred_check_branch
      %17 = sbr.rel (0) target = $region13
    $region12: #{llm_backbone_forward.5} parent=1 // pred_region
      _
    $region13: #{llm_backbone_forward.5} parent=1 // pred_fallthru
      _
    // Predicated region
    $region14: #{llm_backbone_forward.5} parent=1 // pred_check
      _
    $region15: #{llm_backbone_forward.5} parent=1 // pred_check_branch
      %19 = sbr.rel (0) target = $region17
    $region16: #{llm_backbone_forward.5} parent=1 // pred_region
      _
    $region17: #{llm_backbone_forward.5} parent=1 // pred_fallthru
      _
    %v21 = vld [vmem:[%s0] sm:$0xff]
    %v22 = vld [vmem:[%s0 + $0x8] sm:$0xff]
    %v23 = vld [vmem:[%s1] sm:$0x1]
    %v24 = vmul.f32 %v21, %v21
    %v25 = vmul.f32 %v22, %v22
    %vm26 = vcmask 261120
    %v27 = vsel %vm26, %v24, 0.0
    %28 = vadd.xlane.f32.xlu0 %v27
    %v29 = vpop.xlane.xlu0 %28
    %v30 = vsel %vm26, %v25, 0.0
    %31 = vadd.xlane.f32.xlu0 %v30
    %v32 = vpop.xlane.xlu0 %31
    %v33 = vrcp.pop 32.0
    %v34 = vmul.f32 %v29, %v33
    %v35 = vmul.f32 %v32, %v33
    %v36 = vadd.f32 %v34, 1e-05
    %v37 = vadd.f32 %v35, 1e-05
    %v38 = vrsqrt.pop %v36
    %v39 = vrsqrt.pop %v37
    %v40 = vmul.f32 %v21, %v38
    %v41 = vmul.f32 %v22, %v39
    %v43 = vlaneseq
    %v44 = vshrl.u32 %v43, 7
    %v45 = vsub.s32 0, %v44
    %v46 = vrot.slane %v23, %v45
    %v48 = vmul.f32 %v40, %v46
    %v49 = vmul.f32 %v41, %v46
    %v50 = vpack.c.bf16 %v49, %v48
    %v51 = vld [vmem:[%s2] sm:$0xf]
    %v52 = vld [vmem:[%s2 + $0x4] sm:$0xf]
    %v53 = vld [vmem:[%s2 + $0x8] sm:$0xf]
    %v54 = vld [vmem:[%s2 + $0xc] sm:$0xf]
    %v59 = vunpack.c.l.b16 %v51
    %v60 = vunpack.c.l.b16 %v52
    %v61 = vunpack.c.l.b16 %v53
    %v62 = vunpack.c.l.b16 %v54
    %v63 = vpack.c.b16 %v60, %v59
    %v64 = vpack.c.b16 %v62, %v61
    %v68 = vsel %vm26, %v50, 0
    %70 = vmatprep.subr.bf16.mxu0 0
    %71 = vmatpush1.bf16.msra.mxu0 %v63
    %72 = vmatprep.subr.bf16.mxu0 0
    %73 = vmatpush1.bf16.msra.mxu0 %v64
    %74 = vmatprep.subr.bf16.mxu0 0
    %75 = vmatpush1.bf16.msra.mxu0 0
    %76 = vmatprep.subr.bf16.mxu0 0
    %77 = vmatpush1.bf16.msra.mxu0 0
    %78 = vmatprep.subr.bf16.mxu0 0
    %79 = vmatpush1.bf16.msra.mxu0 0
    %80 = vmatprep.subr.bf16.mxu0 0
    %81 = vmatpush1.bf16.msra.mxu0 0
    %82 = vmatprep.subr.bf16.mxu0 0
    %83 = vmatpush1.bf16.msra.mxu0 0
    %84 = vmatprep.subr.bf16.mxu0 0
    %85 = vmatpush1.bf16.msra.mxu0 0
    %86 = vmatprep.subr.bf16.mxu0 0
    %87 = vmatpush1.bf16.msra.mxu0 0
    %88 = vmatprep.subr.bf16.mxu0 0
    %89 = vmatpush1.bf16.msra.mxu0 0
    %90 = vmatprep.subr.bf16.mxu0 0
    %91 = vmatpush1.bf16.msra.mxu0 0
    %92 = vmatprep.subr.bf16.mxu0 0
    %93 = vmatpush1.bf16.msra.mxu0 0
    %94 = vmatprep.subr.bf16.mxu0 0
    %95 = vmatpush1.bf16.msra.mxu0 0
    %96 = vmatprep.subr.bf16.mxu0 0
    %97 = vmatpush1.bf16.msra.mxu0 0
    %98 = vmatprep.subr.bf16.mxu0 0
    %99 = vmatpush1.bf16.msra.mxu0 0
    %100 = vmatprep.subr.bf16.mxu0 0
    %101 = vmatpush1.bf16.msra.mxu0 0
    %102 = vmatprep.mubr.bf16.mxu0 0
    %103 = vmatmul.mubr.bf16.gmra.mrb[0].mxu0 %v68
    %v104 = vpop.f32.mrb[0].mxu0
    %v105 = vadd.f32 0.0, %v104
    %v106 = vpop.f32.mrb[0].mxu0
    %v107 = vpop.f32.mrb[0].mxu0
    %v108 = vadd.f32 0.0, %v107
    %v109 = vpop.f32.mrb[0].mxu0
    %110 = vdwg.mxu0
    %vm111 = vcmask 523264
    %112 = vst.msk [vmem:[#allocation2] sm:$0xff] %vm111, %v105
    %113 = vst.msk [vmem:[#allocation2 + $0x8] sm:$0xff] %vm111, %v108
    %v114 = vld [vmem:[%s3] sm:$0xff]
    %v115 = vld [vmem:[%s3 + $0x8] sm:$0xff]
    %v116 = vsel %vm111, %v105, -inf
    %117 = vmax.xlane.f32.xlu0 %v116
    %v118 = vpop.xlane.xlu0 %117
    %v119 = vsel %vm111, %v108, -inf
    %120 = vmax.xlane.f32.xlu0 %v119
    %v121 = vpop.xlane.xlu0 %120
    %v122 = vsub.f32 %v105, %v118
    %v123 = vsub.f32 %v108, %v121
    %v124 = vmul.f32 %v122, 1.442695
    %v125 = vpow.pop %v124
    %v126 = vmul.f32 %v123, 1.442695
    %v127 = vpow.pop %v126
    %v128 = vsel %vm111, %v125, 0.0
    %129 = vadd.xlane.f32.xlu0 %v128
    %v130 = vpop.xlane.xlu0 %129
    %v131 = vsel %vm111, %v127, 0.0
    %132 = vadd.xlane.f32.xlu0 %v131
    %v133 = vpop.xlane.xlu0 %132
    %v134 = vlog2.pop %v130
    %v135 = vmul.f32 %v134, 0.6931472
    %v136 = vlog2.pop %v133
    %v137 = vmul.f32 %v136, 0.6931472
    %v138 = vadd.f32 %v135, %v118
    %v139 = vadd.f32 %v137, %v121
    %v140 = vlaneseq
    %v141 = vand.u32 %v140, 127
    %142 = vset.pattern.permute.xlu0 0
    %143 = vperm.xlu0 %142, %v114
    %v144 = vpop.permute.xlu0 %143
    %145 = vset.pattern.permute.xlu0 0
    %146 = vperm.xlu0 %145, %v115
    %v147 = vpop.permute.xlu0 %146
    %vm148 = vcmp.eq.s32.totalorder %v141, %v144
    %vm149 = vcmp.eq.s32.totalorder %v141, %v147
    %v150 = vsel %vm148, 1, 0
    %v151 = vsel %vm149, 1, 0
    %v152 = vcvt.s32.f32 %v150
    %v153 = vcvt.s32.f32 %v151
    %v154 = vmul.f32 %v105, %v152
    %v155 = vmul.f32 %v108, %v153
    %v156 = vsel %vm111, %v154, 0.0
    %157 = vadd.xlane.f32.xlu0 %v156
    %v158 = vpop.xlane.xlu0 %157
    %v159 = vsel %vm111, %v155, 0.0
    %160 = vadd.xlane.f32.xlu0 %v159
    %v161 = vpop.xlane.xlu0 %160
    %vm162 = vcmp.ne.s32.totalorder %v114, 4294967196
    %vm163 = vcmp.ne.s32.totalorder %v115, 4294967196
    %v164 = vsel %vm162, 1, 0
    %v165 = vsel %vm163, 1, 0
    %v166 = vcvt.s32.f32 %v164
    %v167 = vcvt.s32.f32 %v165
    %v168 = vsub.f32 %v138, %v158
    %v169 = vsub.f32 %v139, %v161
    %v170 = vmul.f32 %v168, %v166
    %v171 = vmul.f32 %v169, %v167
    %vm172 = vcmask 7168
    %173 = vst.msk [vmem:[%s5] sm:$0xff] %vm172, %v170
    %174 = vst.msk [vmem:[%s5 + $0x8] sm:$0xff] %vm172, %v171
    // Predicated region
    $region18: #{llm_backbone_forward.5} parent=1 // pred_check
      _
    $region19: #{llm_backbone_forward.5} parent=1 // pred_check_branch
      %176 = sbr.rel (0) target = $region21
    $region20: #{llm_backbone_forward.5} parent=1 // pred_region
      %s178 = ssub.s32 256, 256
      %179 = vsyncadd [#allocation3], %s178
      %s180 = sshll.u32 [#allocation2], 4
      %s181 = int_to_ptr.vmem [resolvable:$true] %s180
      %186 = dma.vmem_to_hbm [thread:$0]  %s181, 256, %s4, [#allocation3], 128, 128, 8
    $region21: #{llm_backbone_forward.5} parent=1 // pred_fallthru
      _
    // Predicated region
    $region22: #{llm_backbone_forward.5} parent=1 // pred_check
      _
    $region23: #{llm_backbone_forward.5} parent=1 // pred_check_branch
      %188 = sbr.rel (0) target = $region25
    $region24: #{llm_backbone_forward.5} parent=1 // pred_region
      _
    $region25: #{llm_backbone_forward.5} parent=1 // pred_fallthru
      _
    // Predicated region
    $region26: #{llm_backbone_forward.5} parent=1 // pred_check
      _
    $region27: #{llm_backbone_forward.5} parent=1 // pred_check_branch
      %190 = sbr.rel (0) target = $region29
    $region28: #{llm_backbone_forward.5} parent=1 // pred_region
      %191 = dma.done [#allocation3], 256
    $region29: #{llm_backbone_forward.5} parent=1 // pred_fallthru
      _
    // Predicated region
    $region30: #{llm_backbone_forward.5} parent=1 // pred_check
      _
    $region31: #{llm_backbone_forward.5} parent=1 // pred_check_branch
      %193 = sbr.rel (0) target = $region33
    $region32: #{llm_backbone_forward.5} parent=1 // pred_region
      _
    $region33: #{llm_backbone_forward.5} parent=1 // pred_fallthru
      _
    %194 = vsyncpa [#allocation3], 1

// kernel: llm_backbone_forward.3
$region0: #{llm_backbone_forward.3}
  #allocation0 [shape = 'u32[]', space=smem, size = 0x4, offset = 0x4, fixed_abs, tag = 'smem constant byte address 0x4 - core index']
  #allocation1 [shape = 'u32[144,128]{1,0:T(1,128)}', space=vmem, size = 0x12000, scoped, tag = 'internal scratch']
  %s0 = inlined_call_operand.vmem [shape: f32[16,32], index: 0, kind: input, shape index: {}, may-alias: {0,11}]
  %s1 = inlined_call_operand.vmem [shape: f32[1,32], index: 1, kind: input, shape index: {}, may-alias: {1,4}]
  %s2 = inlined_call_operand.vmem [shape: bf16[32,96], index: 2, kind: input, shape index: {}]
  %s3 = inlined_call_operand.vmem [shape: bf16[32,32], index: 3, kind: input, shape index: {}]
  %s4 = inlined_call_operand.vmem [shape: f32[1,32], index: 4, kind: input, shape index: {}, may-alias: {1,4}]
  %s5 = inlined_call_operand.vmem [shape: bf16[32,128], index: 5, kind: input, shape index: {}]
  %s6 = inlined_call_operand.vmem [shape: bf16[64,32], index: 6, kind: input, shape index: {}]
  %s7 = inlined_call_operand.vmem [shape: f32[16,32], index: 7, kind: input, shape index: {}]
  %s8 = inlined_call_operand.vmem [shape: f32[16,32], index: 8, kind: input, shape index: {}]
  %s9 = inlined_call_operand.vmem [shape: f32[32,32], index: 9, kind: input, shape index: {}]
  %s10 = inlined_call_operand.vmem [shape: f32[16,16], index: 10, kind: input, shape index: {}]
  %s11 = inlined_call_operand.vmem [shape: f32[16,32], index: 11, kind: output, shape index: {}, may-alias: {0,11}]
  %s12 = sld [smem:[#allocation0]]
  $region54: #{llm_backbone_forward.3} parent=0
    _
  %s14 = ssub.s32 1, %s12
  %s15 = scalar_select 0, %s14, %s12
  // Predicated region
  $region2: #{llm_backbone_forward.3} parent=0 // pred_check
    _
  $region3: #{llm_backbone_forward.3} parent=0 // pred_check_branch
    %17 = sbr.rel (0) target = $region5
  $region4: #{llm_backbone_forward.3} parent=0 // pred_region
    _
  $region5: #{llm_backbone_forward.3} parent=0 // pred_fallthru
    _
  // Predicated region
  $region6: #{llm_backbone_forward.3} parent=0 // pred_check
    _
  $region7: #{llm_backbone_forward.3} parent=0 // pred_check_branch
    %19 = sbr.rel (0) target = $region9
  $region8: #{llm_backbone_forward.3} parent=0 // pred_region
    _
  $region9: #{llm_backbone_forward.3} parent=0 // pred_fallthru
    _
  // Predicated region
  $region10: #{llm_backbone_forward.3} parent=0 // pred_check
    _
  $region11: #{llm_backbone_forward.3} parent=0 // pred_check_branch
    %21 = sbr.rel (0) target = $region13
  $region12: #{llm_backbone_forward.3} parent=0 // pred_region
    _
  $region13: #{llm_backbone_forward.3} parent=0 // pred_fallthru
    _
  // Predicated region
  $region14: #{llm_backbone_forward.3} parent=0 // pred_check
    _
  $region15: #{llm_backbone_forward.3} parent=0 // pred_check_branch
    %23 = sbr.rel (0) target = $region17
  $region16: #{llm_backbone_forward.3} parent=0 // pred_region
    _
  $region17: #{llm_backbone_forward.3} parent=0 // pred_fallthru
    _
  // Predicated region
  $region18: #{llm_backbone_forward.3} parent=0 // pred_check
    _
  $region19: #{llm_backbone_forward.3} parent=0 // pred_check_branch
    %25 = sbr.rel (0) target = $region21
  $region20: #{llm_backbone_forward.3} parent=0 // pred_region
    _
  $region21: #{llm_backbone_forward.3} parent=0 // pred_fallthru
    _
  // Predicated region
  $region22: #{llm_backbone_forward.3} parent=0 // pred_check
    _
  $region23: #{llm_backbone_forward.3} parent=0 // pred_check_branch
    %27 = sbr.rel (0) target = $region25
  $region24: #{llm_backbone_forward.3} parent=0 // pred_region
    _
  $region25: #{llm_backbone_forward.3} parent=0 // pred_fallthru
    _
  // Predicated region
  $region26: #{llm_backbone_forward.3} parent=0 // pred_check
    _
  $region27: #{llm_backbone_forward.3} parent=0 // pred_check_branch
    %29 = sbr.rel (0) target = $region29
  $region28: #{llm_backbone_forward.3} parent=0 // pred_region
    _
  $region29: #{llm_backbone_forward.3} parent=0 // pred_fallthru
    _
  // Predicated region
  $region30: #{llm_backbone_forward.3} parent=0 // pred_check
    _
  $region31: #{llm_backbone_forward.3} parent=0 // pred_check_branch
    %31 = sbr.rel (0) target = $region33
  $region32: #{llm_backbone_forward.3} parent=0 // pred_region
    _
  $region33: #{llm_backbone_forward.3} parent=0 // pred_fallthru
    _
  // Predicated region
  $region34: #{llm_backbone_forward.3} parent=0 // pred_check
    _
  $region35: #{llm_backbone_forward.3} parent=0 // pred_check_branch
    %33 = sbr.rel (0) target = $region37
  $region36: #{llm_backbone_forward.3} parent=0 // pred_region
    _
  $region37: #{llm_backbone_forward.3} parent=0 // pred_fallthru
    _
  // Predicated region
  $region38: #{llm_backbone_forward.3} parent=0 // pred_check
    _
  $region39: #{llm_backbone_forward.3} parent=0 // pred_check_branch
    %35 = sbr.rel (0) target = $region41
  $region40: #{llm_backbone_forward.3} parent=0 // pred_region
    _
  $region41: #{llm_backbone_forward.3} parent=0 // pred_fallthru
    _
  // Predicated region
  $region42: #{llm_backbone_forward.3} parent=0 // pred_check
    _
  $region43: #{llm_backbone_forward.3} parent=0 // pred_check_branch
    %37 = sbr.rel (0) target = $region45
  $region44: #{llm_backbone_forward.3} parent=0 // pred_region
    _
  $region45: #{llm_backbone_forward.3} parent=0 // pred_fallthru
    _
  %v39 = vld [vmem:[%s0] sm:$0xff]
  %v40 = vld [vmem:[%s0 + $0x8] sm:$0xff]
  %v41 = vld [vmem:[%s1] sm:$0x1]
  %v42 = vmul.f32 %v39, %v39
  %v43 = vmul.f32 %v40, %v40
  %vm44 = vcmask 261120
  %v45 = vsel %vm44, %v42, 0.0
  %46 = vadd.xlane.f32.xlu0 %v45
  %v47 = vpop.xlane.xlu0 %46
  %v48 = vsel %vm44, %v43, 0.0
  %49 = vadd.xlane.f32.xlu0 %v48
  %v50 = vpop.xlane.xlu0 %49
  %v51 = vrcp.pop 32.0
  %v52 = vmul.f32 %v47, %v51
  %v53 = vmul.f32 %v50, %v51
  %v54 = vadd.f32 %v52, 1e-05
  %v55 = vadd.f32 %v53, 1e-05
  %v56 = vrsqrt.pop %v54
  %v57 = vrsqrt.pop %v55
  %v58 = vmul.f32 %v39, %v56
  %v59 = vmul.f32 %v40, %v57
  %v61 = vlaneseq
  %v62 = vshrl.u32 %v61, 7
  %v63 = vsub.s32 0, %v62
  %v64 = vrot.slane %v41, %v63
  %v66 = vmul.f32 %v58, %v64
  %v67 = vmul.f32 %v59, %v64
  %v68 = vpack.c.bf16 %v67, %v66
  %v69 = vld [vmem:[%s2] sm:$0xf]
  %v70 = vld [vmem:[%s2 + $0x4] sm:$0xf]
  %v71 = vld [vmem:[%s2 + $0x8] sm:$0xf]
  %v72 = vld [vmem:[%s2 + $0xc] sm:$0xf]
  %v77 = vunpack.c.l.b16 %v69
  %v78 = vunpack.c.l.b16 %v70
  %v79 = vunpack.c.l.b16 %v71
  %v80 = vunpack.c.l.b16 %v72
  %v81 = vpack.c.b16 %v78, %v77
  %v82 = vpack.c.b16 %v80, %v79
  %v86 = vsel %vm44, %v68, 0
  %88 = vmatprep.subr.bf16.mxu0 0
  %89 = vmatpush1.bf16.msra.mxu0 %v81
  %90 = vmatprep.subr.bf16.mxu0 0
  %91 = vmatpush1.bf16.msra.mxu0 %v82
  %92 = vmatprep.subr.bf16.mxu0 0
  %93 = vmatpush1.bf16.msra.mxu0 0
  %94 = vmatprep.subr.bf16.mxu0 0
  %95 = vmatpush1.bf16.msra.mxu0 0
  %96 = vmatprep.subr.bf16.mxu0 0
  %97 = vmatpush1.bf16.msra.mxu0 0
  %98 = vmatprep.subr.bf16.mxu0 0
  %99 = vmatpush1.bf16.msra.mxu0 0
  %100 = vmatprep.subr.bf16.mxu0 0
  %101 = vmatpush1.bf16.msra.mxu0 0
  %102 = vmatprep.subr.bf16.mxu0 0
  %103 = vmatpush1.bf16.msra.mxu0 0
  %104 = vmatprep.subr.bf16.mxu0 0
  %105 = vmatpush1.bf16.msra.mxu0 0
  %106 = vmatprep.subr.bf16.mxu0 0
  %107 = vmatpush1.bf16.msra.mxu0 0
  %108 = vmatprep.subr.bf16.mxu0 0
  %109 = vmatpush1.bf16.msra.mxu0 0
  %110 = vmatprep.subr.bf16.mxu0 0
  %111 = vmatpush1.bf16.msra.mxu0 0
  %112 = vmatprep.subr.bf16.mxu0 0
  %113 = vmatpush1.bf16.msra.mxu0 0
  %114 = vmatprep.subr.bf16.mxu0 0
  %115 = vmatpush1.bf16.msra.mxu0 0
  %116 = vmatprep.subr.bf16.mxu0 0
  %117 = vmatpush1.bf16.msra.mxu0 0
  %118 = vmatprep.subr.bf16.mxu0 0
  %119 = vmatpush1.bf16.msra.mxu0 0
  %120 = vmatprep.mubr.bf16.mxu0 0
  %121 = vmatmul.mubr.bf16.gmra.mrb[0].mxu0 %v86
  %v122 = vpop.f32.mrb[0].mxu0
  %v123 = vadd.f32 0.0, %v122
  %v124 = vpop.f32.mrb[0].mxu0
  %v125 = vpop.f32.mrb[0].mxu0
  %v126 = vadd.f32 0.0, %v125
  %v127 = vpop.f32.mrb[0].mxu0
  %128 = vdwg.mxu0
  %v129 = vld [vmem:[%s7] sm:$0xff]
  %v130 = vld [vmem:[%s7 + $0x8] sm:$0xff]
  %v131 = vld [vmem:[%s8] sm:$0xff]
  %v132 = vld [vmem:[%s8 + $0x8] sm:$0xff]
  %v133 = vld [vmem:[%s9] sm:$0xff]
  %v134 = vld [vmem:[%s9 + $0x8] sm:$0xff]
  %v135 = vld [vmem:[%s9 + $0x10] sm:$0xff]
  %v136 = vld [vmem:[%s9 + $0x18] sm:$0xff]
  %v137 = vmul.f32 %v123, %v129
  %v138 = vmul.f32 %v126, %v130
  %v140 = vsel %vm44, %v123, 0
  %v143 = vsel %vm44, %v126, 0
  %145 = vmatprep.subr.mxu0 0.0
  %146 = vmatpush1.msra.mxu0 %v133
  %147 = vmatprep.subr.mxu0 0.0
  %148 = vmatpush1.msra.mxu0 %v134
  %149 = vmatprep.subr.mxu0 0.0
  %150 = vmatpush1.msra.mxu0 %v135
  %151 = vmatprep.subr.mxu0 0.0
  %152 = vmatpush1.msra.mxu0 %v136
  %153 = vmatprep.subr.mxu0 0.0
  %154 = vmatpush1.msra.mxu0 0.0
  %155 = vmatprep.subr.mxu0 0.0
  %156 = vmatpush1.msra.mxu0 0.0
  %157 = vmatprep.subr.mxu0 0.0
  %158 = vmatpush1.msra.mxu0 0.0
  %159 = vmatprep.subr.mxu0 0.0
  %160 = vmatpush1.msra.mxu0 0.0
  %161 = vmatprep.subr.mxu0 0.0
  %162 = vmatpush1.msra.mxu0 0.0
  %163 = vmatprep.subr.mxu0 0.0
  %164 = vmatpush1.msra.mxu0 0.0
  %165 = vmatprep.subr.mxu0 0.0
  %166 = vmatpush1.msra.mxu0 0.0
  %167 = vmatprep.subr.mxu0 0.0
  %168 = vmatpush1.msra.mxu0 0.0
  %169 = vmatprep.subr.mxu0 0.0
  %170 = vmatpush1.msra.mxu0 0.0
  %171 = vmatprep.subr.mxu0 0.0
  %172 = vmatpush1.msra.mxu0 0.0
  %173 = vmatprep.subr.mxu0 0.0
  %174 = vmatpush1.msra.mxu0 0.0
  %175 = vmatprep.subr.mxu0 0.0
  %176 = vmatpush1.msra.mxu0 0.0
  %177 = vmatprep.subr.mxu0 0.0
  %178 = vmatpush1.msra.mxu0 0.0
  %179 = vmatprep.subr.mxu0 0.0
  %180 = vmatpush1.msra.mxu0 0.0
  %181 = vmatprep.subr.mxu0 0.0
  %182 = vmatpush1.msra.mxu0 0.0
  %183 = vmatprep.subr.mxu0 0.0
  %184 = vmatpush1.msra.mxu0 0.0
  %185 = vmatprep.subr.mxu0 0.0
  %186 = vmatpush1.msra.mxu0 0.0
  %187 = vmatprep.subr.mxu0 0.0
  %188 = vmatpush1.msra.mxu0 0.0
  %189 = vmatprep.subr.mxu0 0.0
  %190 = vmatpush1.msra.mxu0 0.0
  %191 = vmatprep.subr.mxu0 0.0
  %192 = vmatpush1.msra.mxu0 0.0
  %193 = vmatprep.subr.mxu0 0.0
  %194 = vmatpush1.msra.mxu0 0.0
  %195 = vmatprep.subr.mxu0 0.0
  %196 = vmatpush1.msra.mxu0 0.0
  %197 = vmatprep.subr.mxu0 0.0
  %198 = vmatpush1.msra.mxu0 0.0
  %199 = vmatprep.subr.mxu0 0.0
  %200 = vmatpush1.msra.mxu0 0.0
  %201 = vmatprep.subr.mxu0 0.0
  %202 = vmatpush1.msra.mxu0 0.0
  %203 = vmatprep.subr.mxu0 0.0
  %204 = vmatpush1.msra.mxu0 0.0
  %205 = vmatprep.subr.mxu0 0.0
  %206 = vmatpush1.msra.mxu0 0.0
  %207 = vmatprep.subr.mxu0 0.0
  %208 = vmatpush1.msra.mxu0 0.0
  %209 = vmatprep.mubr.f32.mxu0 0.0
  %210 = vmatmul.mubr.f32.gmra.mrb[0].mxu0 %v140
  %v211 = vpop.f32.mrb[0].mxu0
  %v212 = vadd.f32 0.0, %v211
  %v213 = vpop.f32.mrb[0].mxu0
  %214 = vmatprep.mubr.f32.mxu0 0.0
  %215 = vmatmul.mubr.f32.gmra.mrb[0].mxu0 %v143
  %v216 = vpop.f32.mrb[0].mxu0
  %v217 = vadd.f32 0.0, %v216
  %v218 = vpop.f32.mrb[0].mxu0
  %219 = vdwg.mxu0
  %v220 = vmul.f32 %v212, %v131
  %v221 = vmul.f32 %v217, %v132
  %v222 = vadd.f32 %v137, %v220
  %v223 = vadd.f32 %v138, %v221
  %226 = vrot.lane.b32.xlu0 %v129, 32
  %v227 = vpop.permute.xlu0 %226
  %228 = vrot.lane.b32.xlu0 %v130, 32
  %v229 = vpop.permute.xlu0 %228
  %v232 = vmul.f32 %v123, %v227
  %v233 = vmul.f32 %v126, %v229
  %234 = vrot.lane.b32.xlu0 %v123, 96
  %v235 = vpop.permute.xlu0 %234
  %236 = vrot.lane.b32.xlu0 %v126, 96
  %v237 = vpop.permute.xlu0 %236
  %v238 = vsel %vm44, %v235, 0
  %v240 = vsel %vm44, %v237, 0
  %242 = vmatprep.subr.mxu0 0.0
  %243 = vmatpush1.msra.mxu0 %v133
  %244 = vmatprep.subr.mxu0 0.0
  %245 = vmatpush1.msra.mxu0 %v134
  %246 = vmatprep.subr.mxu0 0.0
  %247 = vmatpush1.msra.mxu0 %v135
  %248 = vmatprep.subr.mxu0 0.0
  %249 = vmatpush1.msra.mxu0 %v136
  %250 = vmatprep.subr.mxu0 0.0
  %251 = vmatpush1.msra.mxu0 0.0
  %252 = vmatprep.subr.mxu0 0.0
  %253 = vmatpush1.msra.mxu0 0.0
  %254 = vmatprep.subr.mxu0 0.0
  %255 = vmatpush1.msra.mxu0 0.0
  %256 = vmatprep.subr.mxu0 0.0
  %257 = vmatpush1.msra.mxu0 0.0
  %258 = vmatprep.subr.mxu0 0.0
  %259 = vmatpush1.msra.mxu0 0.0
  %260 = vmatprep.subr.mxu0 0.0
  %261 = vmatpush1.msra.mxu0 0.0
  %262 = vmatprep.subr.mxu0 0.0
  %263 = vmatpush1.msra.mxu0 0.0
  %264 = vmatprep.subr.mxu0 0.0
  %265 = vmatpush1.msra.mxu0 0.0
  %266 = vmatprep.subr.mxu0 0.0
  %267 = vmatpush1.msra.mxu0 0.0
  %268 = vmatprep.subr.mxu0 0.0
  %269 = vmatpush1.msra.mxu0 0.0
  %270 = vmatprep.subr.mxu0 0.0
  %271 = vmatpush1.msra.mxu0 0.0
  %272 = vmatprep.subr.mxu0 0.0
  %273 = vmatpush1.msra.mxu0 0.0
  %274 = vmatprep.subr.mxu0 0.0
  %275 = vmatpush1.msra.mxu0 0.0
  %276 = vmatprep.subr.mxu0 0.0
  %277 = vmatpush1.msra.mxu0 0.0
  %278 = vmatprep.subr.mxu0 0.0
  %279 = vmatpush1.msra.mxu0 0.0
  %280 = vmatprep.subr.mxu0 0.0
  %281 = vmatpush1.msra.mxu0 0.0
  %282 = vmatprep.subr.mxu0 0.0
  %283 = vmatpush1.msra.mxu0 0.0
  %284 = vmatprep.subr.mxu0 0.0
  %285 = vmatpush1.msra.mxu0 0.0
  %286 = vmatprep.subr.mxu0 0.0
  %287 = vmatpush1.msra.mxu0 0.0
  %288 = vmatprep.subr.mxu0 0.0
  %289 = vmatpush1.msra.mxu0 0.0
  %290 = vmatprep.subr.mxu0 0.0
  %291 = vmatpush1.msra.mxu0 0.0
  %292 = vmatprep.subr.mxu0 0.0
  %293 = vmatpush1.msra.mxu0 0.0
  %294 = vmatprep.subr.mxu0 0.0
  %295 = vmatpush1.msra.mxu0 0.0
  %296 = vmatprep.subr.mxu0 0.0
  %297 = vmatpush1.msra.mxu0 0.0
  %298 = vmatprep.subr.mxu0 0.0
  %299 = vmatpush1.msra.mxu0 0.0
  %300 = vmatprep.subr.mxu0 0.0
  %301 = vmatpush1.msra.mxu0 0.0
  %302 = vmatprep.subr.mxu0 0.0
  %303 = vmatpush1.msra.mxu0 0.0
  %304 = vmatprep.subr.mxu0 0.0
  %305 = vmatpush1.msra.mxu0 0.0
  %306 = vmatprep.mubr.f32.mxu0 0.0
  %307 = vmatmul.mubr.f32.gmra.mrb[0].mxu0 %v238
  %v308 = vpop.f32.mrb[0].mxu0
  %v309 = vadd.f32 0.0, %v308
  %v310 = vpop.f32.mrb[0].mxu0
  %311 = vmatprep.mubr.f32.mxu0 0.0
  %312 = vmatmul.mubr.f32.gmra.mrb[0].mxu0 %v240
  %v313 = vpop.f32.mrb[0].mxu0
  %v314 = vadd.f32 0.0, %v313
  %v315 = vpop.f32.mrb[0].mxu0
  %316 = vdwg.mxu0
  %v317 = vmul.f32 %v309, %v131
  %v318 = vmul.f32 %v314, %v132
  %321 = vrot.lane.b32.xlu0 %v317, 32
  %v322 = vpop.permute.xlu0 %321
  %323 = vrot.lane.b32.xlu0 %v318, 32
  %v324 = vpop.permute.xlu0 %323
  %v327 = vadd.f32 %v232, %v322
  %v328 = vadd.f32 %v233, %v324
  %v329 = vld [vmem:[%s10] sm:$0xff]
  %v330 = vld [vmem:[%s10 + $0x8] sm:$0xff]
  %v331 = vld [vmem:[%s3] sm:$0xf]
  %v332 = vld [vmem:[%s3 + $0x4] sm:$0xf]
  %v333 = vld [vmem:[%s3 + $0x8] sm:$0xf]
  %v334 = vld [vmem:[%s3 + $0xc] sm:$0xf]
  %v335 = vpack.c.bf16 %v223, %v222
  %v336 = vpack.c.bf16 %v328, %v327
  %v337 = vpack.c.bf16 %v126, %v123
  %339 = vrot.lane.b32.xlu0 %v336, 96
  %v340 = vpop.permute.xlu0 %339
  %vm341 = vcmask 130048
  %v343 = vsel %vm341, %v335, 0
  %v346 = vsel %vm341, %v340, 0
  %348 = vmatprep.subr.bf16.mxu0 0
  %349 = vmatpush1.bf16.xpose.msra.mxu0 %v346
  %350 = vmatprep.subr.bf16.mxu0 0
  %351 = vmatpush1.bf16.xpose.msra.mxu0 0
  %352 = vmatprep.subr.bf16.mxu0 0
  %353 = vmatpush1.bf16.xpose.msra.mxu0 0
  %354 = vmatprep.subr.bf16.mxu0 0
  %355 = vmatpush1.bf16.xpose.msra.mxu0 0
  %356 = vmatprep.subr.bf16.mxu0 0
  %357 = vmatpush1.bf16.xpose.msra.mxu0 0
  %358 = vmatprep.subr.bf16.mxu0 0
  %359 = vmatpush1.bf16.xpose.msra.mxu0 0
  %360 = vmatprep.subr.bf16.mxu0 0
  %361 = vmatpush1.bf16.xpose.msra.mxu0 0
  %362 = vmatprep.subr.bf16.mxu0 0
  %363 = vmatpush1.bf16.xpose.msra.mxu0 0
  %364 = vmatprep.subr.bf16.mxu0 0
  %365 = vmatpush1.bf16.xpose.msra.mxu0 0
  %366 = vmatprep.subr.bf16.mxu0 0
  %367 = vmatpush1.bf16.xpose.msra.mxu0 0
  %368 = vmatprep.subr.bf16.mxu0 0
  %369 = vmatpush1.bf16.xpose.msra.mxu0 0
  %370 = vmatprep.subr.bf16.mxu0 0
  %371 = vmatpush1.bf16.xpose.msra.mxu0 0
  %372 = vmatprep.subr.bf16.mxu0 0
  %373 = vmatpush1.bf16.xpose.msra.mxu0 0
  %374 = vmatprep.subr.bf16.mxu0 0
  %375 = vmatpush1.bf16.xpose.msra.mxu0 0
  %376 = vmatprep.subr.bf16.mxu0 0
  %377 = vmatpush1.bf16.xpose.msra.mxu0 0
  %378 = vmatprep.subr.bf16.mxu0 0
  %379 = vmatpush1.bf16.xpose.msra.mxu0 0
  %380 = vmatprep.mubr.bf16.mxu0 0
  %381 = vmatmul.mubr.bf16.gmra.mrb[0].mxu0 %v343
  %v382 = vpop.f32.mrb[0].mxu0
  %v383 = vadd.f32 0.0, %v382
  %v384 = vpop.f32.mrb[0].mxu0
  %v385 = vpop.f32.mrb[0].mxu0
  %v386 = vadd.f32 0.0, %v385
  %v387 = vpop.f32.mrb[0].mxu0
  %388 = vdwg.mxu0
  %v389 = vmul.f32 %v383, 0.25
  %v390 = vmul.f32 %v386, 0.25
  %v391 = vadd.f32 %v389, %v329
  %v392 = vadd.f32 %v390, %v330
  %v393 = vsel %vm341, %v391, -inf
  %394 = vmax.xlane.f32.xlu0 %v393
  %v395 = vpop.xlane.xlu0 %394
  %v396 = vsel %vm341, %v392, -inf
  %397 = vmax.xlane.f32.xlu0 %v396
  %v398 = vpop.xlane.xlu0 %397
  %v399 = vsub.f32 %v391, %v395
  %v400 = vsub.f32 %v392, %v398
  %v401 = vmul.f32 %v399, 1.442695
  %v402 = vpow.pop %v401
  %v403 = vmul.f32 %v400, 1.442695
  %v404 = vpow.pop %v403
  %v405 = vsel %vm341, %v402, 0.0
  %406 = vadd.xlane.f32.xlu0 %v405
  %v407 = vpop.xlane.xlu0 %406
  %v408 = vsel %vm341, %v404, 0.0
  %409 = vadd.xlane.f32.xlu0 %v408
  %v410 = vpop.xlane.xlu0 %409
  %v411 = vrcp.pop %v407
  %v412 = vrcp.pop %v410
  %v413 = vmul.f32 %v402, %v411
  %v414 = vmul.f32 %v404, %v412
  %v415 = vpack.c.bf16 %v414, %v413
  %417 = vrot.lane.b32.xlu0 %v337, 64
  %v418 = vpop.permute.xlu0 %417
  %v421 = vsel %vm341, %v415, 0
  %423 = vmatprep.subr.bf16.mxu0 0
  %424 = vmatpush1.bf16.msra.mxu0 %v418
  %425 = vmatprep.subr.bf16.mxu0 0
  %426 = vmatpush1.bf16.msra.mxu0 0
  %427 = vmatprep.subr.bf16.mxu0 0
  %428 = vmatpush1.bf16.msra.mxu0 0
  %429 = vmatprep.subr.bf16.mxu0 0
  %430 = vmatpush1.bf16.msra.mxu0 0
  %431 = vmatprep.subr.bf16.mxu0 0
  %432 = vmatpush1.bf16.msra.mxu0 0
  %433 = vmatprep.subr.bf16.mxu0 0
  %434 = vmatpush1.bf16.msra.mxu0 0
  %435 = vmatprep.subr.bf16.mxu0 0
  %436 = vmatpush1.bf16.msra.mxu0 0
  %437 = vmatprep.subr.bf16.mxu0 0
  %438 = vmatpush1.bf16.msra.mxu0 0
  %439 = vmatprep.subr.bf16.mxu0 0
  %440 = vmatpush1.bf16.msra.mxu0 0
  %441 = vmatprep.subr.bf16.mxu0 0
  %442 = vmatpush1.bf16.msra.mxu0 0
  %443 = vmatprep.subr.bf16.mxu0 0
  %444 = vmatpush1.bf16.msra.mxu0 0
  %445 = vmatprep.subr.bf16.mxu0 0
  %446 = vmatpush1.bf16.msra.mxu0 0
  %447 = vmatprep.subr.bf16.mxu0 0
  %448 = vmatpush1.bf16.msra.mxu0 0
  %449 = vmatprep.subr.bf16.mxu0 0
  %450 = vmatpush1.bf16.msra.mxu0 0
  %451 = vmatprep.subr.bf16.mxu0 0
  %452 = vmatpush1.bf16.msra.mxu0 0
  %453 = vmatprep.subr.bf16.mxu0 0
  %454 = vmatpush1.bf16.msra.mxu0 0
  %455 = vmatprep.mubr.bf16.mxu0 0
  %456 = vmatmul.mubr.bf16.gmra.mrb[0].mxu0 %v421
  %v457 = vpop.f32.mrb[0].mxu0
  %v458 = vadd.f32 0.0, %v457
  %v459 = vpop.f32.mrb[0].mxu0
  %v460 = vpop.f32.mrb[0].mxu0
  %v461 = vadd.f32 0.0, %v460
  %v462 = vpop.f32.mrb[0].mxu0
  %463 = vdwg.mxu0
  %v464 = vpack.c.bf16 %v461, %v458
  %466 = vrot.lane.b32.xlu0 %v335, 112
  %v467 = vpop.permute.xlu0 %466
  %468 = vrot.lane.b32.xlu0 %v336, 80
  %v469 = vpop.permute.xlu0 %468
  %v471 = vsel %vm341, %v467, 0
  %v474 = vsel %vm341, %v469, 0
  %476 = vmatprep.subr.bf16.mxu0 0
  %477 = vmatpush1.bf16.xpose.msra.mxu0 %v474
  %478 = vmatprep.subr.bf16.mxu0 0
  %479 = vmatpush1.bf16.xpose.msra.mxu0 0
  %480 = vmatprep.subr.bf16.mxu0 0
  %481 = vmatpush1.bf16.xpose.msra.mxu0 0
  %482 = vmatprep.subr.bf16.mxu0 0
  %483 = vmatpush1.bf16.xpose.msra.mxu0 0
  %484 = vmatprep.subr.bf16.mxu0 0
  %485 = vmatpush1.bf16.xpose.msra.mxu0 0
  %486 = vmatprep.subr.bf16.mxu0 0
  %487 = vmatpush1.bf16.xpose.msra.mxu0 0
  %488 = vmatprep.subr.bf16.mxu0 0
  %489 = vmatpush1.bf16.xpose.msra.mxu0 0
  %490 = vmatprep.subr.bf16.mxu0 0
  %491 = vmatpush1.bf16.xpose.msra.mxu0 0
  %492 = vmatprep.subr.bf16.mxu0 0
  %493 = vmatpush1.bf16.xpose.msra.mxu0 0
  %494 = vmatprep.subr.bf16.mxu0 0
  %495 = vmatpush1.bf16.xpose.msra.mxu0 0
  %496 = vmatprep.subr.bf16.mxu0 0
  %497 = vmatpush1.bf16.xpose.msra.mxu0 0
  %498 = vmatprep.subr.bf16.mxu0 0
  %499 = vmatpush1.bf16.xpose.msra.mxu0 0
  %500 = vmatprep.subr.bf16.mxu0 0
  %501 = vmatpush1.bf16.xpose.msra.mxu0 0
  %502 = vmatprep.subr.bf16.mxu0 0
  %503 = vmatpush1.bf16.xpose.msra.mxu0 0
  %504 = vmatprep.subr.bf16.mxu0 0
  %505 = vmatpush1.bf16.xpose.msra.mxu0 0
  %506 = vmatprep.subr.bf16.mxu0 0
  %507 = vmatpush1.bf16.xpose.msra.mxu0 0
  %508 = vmatprep.mubr.bf16.mxu0 0
  %509 = vmatmul.mubr.bf16.gmra.mrb[0].mxu0 %v471
  %v510 = vpop.f32.mrb[0].mxu0
  %v511 = vadd.f32 0.0, %v510
  %v512 = vpop.f32.mrb[0].mxu0
  %v513 = vpop.f32.mrb[0].mxu0
  %v514 = vadd.f32 0.0, %v513
  %v515 = vpop.f32.mrb[0].mxu0
  %516 = vdwg.mxu0
  %v517 = vmul.f32 %v511, 0.25
  %v518 = vmul.f32 %v514, 0.25
  %v519 = vadd.f32 %v517, %v329
  %v520 = vadd.f32 %v518, %v330
  %v521 = vsel %vm341, %v519, -inf
  %522 = vmax.xlane.f32.xlu0 %v521
  %v523 = vpop.xlane.xlu0 %522
  %v524 = vsel %vm341, %v520, -inf
  %525 = vmax.xlane.f32.xlu0 %v524
  %v526 = vpop.xlane.xlu0 %525
  %v527 = vsub.f32 %v519, %v523
  %v528 = vsub.f32 %v520, %v526
  %v529 = vmul.f32 %v527, 1.442695
  %v530 = vpow.pop %v529
  %v531 = vmul.f32 %v528, 1.442695
  %v532 = vpow.pop %v531
  %v533 = vsel %vm341, %v530, 0.0
  %534 = vadd.xlane.f32.xlu0 %v533
  %v535 = vpop.xlane.xlu0 %534
  %v536 = vsel %vm341, %v532, 0.0
  %537 = vadd.xlane.f32.xlu0 %v536
  %v538 = vpop.xlane.xlu0 %537
  %v539 = vrcp.pop %v535
  %v540 = vrcp.pop %v538
  %v541 = vmul.f32 %v530, %v539
  %v542 = vmul.f32 %v532, %v540
  %v543 = vpack.c.bf16 %v542, %v541
  %544 = vrot.lane.b32.xlu0 %v337, 48
  %v545 = vpop.permute.xlu0 %544
  %v548 = vsel %vm341, %v543, 0
  %550 = vmatprep.subr.bf16.mxu0 0
  %551 = vmatpush1.bf16.msra.mxu0 %v545
  %552 = vmatprep.subr.bf16.mxu0 0
  %553 = vmatpush1.bf16.msra.mxu0 0
  %554 = vmatprep.subr.bf16.mxu0 0
  %555 = vmatpush1.bf16.msra.mxu0 0
  %556 = vmatprep.subr.bf16.mxu0 0
  %557 = vmatpush1.bf16.msra.mxu0 0
  %558 = vmatprep.subr.bf16.mxu0 0
  %559 = vmatpush1.bf16.msra.mxu0 0
  %560 = vmatprep.subr.bf16.mxu0 0
  %561 = vmatpush1.bf16.msra.mxu0 0
  %562 = vmatprep.subr.bf16.mxu0 0
  %563 = vmatpush1.bf16.msra.mxu0 0
  %564 = vmatprep.subr.bf16.mxu0 0
  %565 = vmatpush1.bf16.msra.mxu0 0
  %566 = vmatprep.subr.bf16.mxu0 0
  %567 = vmatpush1.bf16.msra.mxu0 0
  %568 = vmatprep.subr.bf16.mxu0 0
  %569 = vmatpush1.bf16.msra.mxu0 0
  %570 = vmatprep.subr.bf16.mxu0 0
  %571 = vmatpush1.bf16.msra.mxu0 0
  %572 = vmatprep.subr.bf16.mxu0 0
  %573 = vmatpush1.bf16.msra.mxu0 0
  %574 = vmatprep.subr.bf16.mxu0 0
  %575 = vmatpush1.bf16.msra.mxu0 0
  %576 = vmatprep.subr.bf16.mxu0 0
  %577 = vmatpush1.bf16.msra.mxu0 0
  %578 = vmatprep.subr.bf16.mxu0 0
  %579 = vmatpush1.bf16.msra.mxu0 0
  %580 = vmatprep.subr.bf16.mxu0 0
  %581 = vmatpush1.bf16.msra.mxu0 0
  %582 = vmatprep.mubr.bf16.mxu0 0
  %583 = vmatmul.mubr.bf16.gmra.mrb[0].mxu0 %v548
  %v584 = vpop.f32.mrb[0].mxu0
  %v585 = vadd.f32 0.0, %v584
  %v586 = vpop.f32.mrb[0].mxu0
  %v587 = vpop.f32.mrb[0].mxu0
  %v588 = vadd.f32 0.0, %v587
  %v589 = vpop.f32.mrb[0].mxu0
  %590 = vdwg.mxu0
  %v591 = vpack.c.bf16 %v588, %v585
  %v594 = vunpack.c.l.b16 %v333
  %v595 = vunpack.c.l.b16 %v334
  %v596 = vpack.c.b16 %v595, %v594
  %v599 = vsel %vm341, %v591, 0
  %601 = vmatprep.subr.bf16.mxu0 0
  %602 = vmatpush1.bf16.msra.mxu0 %v596
  %603 = vmatprep.subr.bf16.mxu0 0
  %604 = vmatpush1.bf16.msra.mxu0 0
  %605 = vmatprep.subr.bf16.mxu0 0
  %606 = vmatpush1.bf16.msra.mxu0 0
  %607 = vmatprep.subr.bf16.mxu0 0
  %608 = vmatpush1.bf16.msra.mxu0 0
  %609 = vmatprep.subr.bf16.mxu0 0
  %610 = vmatpush1.bf16.msra.mxu0 0
  %611 = vmatprep.subr.bf16.mxu0 0
  %612 = vmatpush1.bf16.msra.mxu0 0
  %613 = vmatprep.subr.bf16.mxu0 0
  %614 = vmatpush1.bf16.msra.mxu0 0
  %615 = vmatprep.subr.bf16.mxu0 0
  %616 = vmatpush1.bf16.msra.mxu0 0
  %617 = vmatprep.subr.bf16.mxu0 0
  %618 = vmatpush1.bf16.msra.mxu0 0
  %619 = vmatprep.subr.bf16.mxu0 0
  %620 = vmatpush1.bf16.msra.mxu0 0
  %621 = vmatprep.subr.bf16.mxu0 0
  %622 = vmatpush1.bf16.msra.mxu0 0
  %623 = vmatprep.subr.bf16.mxu0 0
  %624 = vmatpush1.bf16.msra.mxu0 0
  %625 = vmatprep.subr.bf16.mxu0 0
  %626 = vmatpush1.bf16.msra.mxu0 0
  %627 = vmatprep.subr.bf16.mxu0 0
  %628 = vmatpush1.bf16.msra.mxu0 0
  %629 = vmatprep.subr.bf16.mxu0 0
  %630 = vmatpush1.bf16.msra.mxu0 0
  %631 = vmatprep.subr.bf16.mxu0 0
  %632 = vmatpush1.bf16.msra.mxu0 0
  %633 = vmatprep.mubr.bf16.mxu0 0
  %634 = vmatmul.mubr.bf16.gmra.mrb[0].mxu0 %v599
  %v635 = vpop.f32.mrb[0].mxu0
  %v636 = vadd.f32 0.0, %v635
  %v637 = vpop.f32.mrb[0].mxu0
  %v638 = vpop.f32.mrb[0].mxu0
  %v639 = vadd.f32 0.0, %v638
  %v640 = vpop.f32.mrb[0].mxu0
  %641 = vdwg.mxu0
  %v644 = vunpack.c.l.b16 %v331
  %v645 = vunpack.c.l.b16 %v332
  %v646 = vpack.c.b16 %v645, %v644
  %v649 = vsel %vm341, %v464, 0
  %651 = vmatprep.subr.bf16.mxu0 0
  %652 = vmatpush1.bf16.msra.mxu0 %v646
  %653 = vmatprep.subr.bf16.mxu0 0
  %654 = vmatpush1.bf16.msra.mxu0 0
  %655 = vmatprep.subr.bf16.mxu0 0
  %656 = vmatpush1.bf16.msra.mxu0 0
  %657 = vmatprep.subr.bf16.mxu0 0
  %658 = vmatpush1.bf16.msra.mxu0 0
  %659 = vmatprep.subr.bf16.mxu0 0
  %660 = vmatpush1.bf16.msra.mxu0 0
  %661 = vmatprep.subr.bf16.mxu0 0
  %662 = vmatpush1.bf16.msra.mxu0 0
  %663 = vmatprep.subr.bf16.mxu0 0
  %664 = vmatpush1.bf16.msra.mxu0 0
  %665 = vmatprep.subr.bf16.mxu0 0
  %666 = vmatpush1.bf16.msra.mxu0 0
  %667 = vmatprep.subr.bf16.mxu0 0
  %668 = vmatpush1.bf16.msra.mxu0 0
  %669 = vmatprep.subr.bf16.mxu0 0
  %670 = vmatpush1.bf16.msra.mxu0 0
  %671 = vmatprep.subr.bf16.mxu0 0
  %672 = vmatpush1.bf16.msra.mxu0 0
  %673 = vmatprep.subr.bf16.mxu0 0
  %674 = vmatpush1.bf16.msra.mxu0 0
  %675 = vmatprep.subr.bf16.mxu0 0
  %676 = vmatpush1.bf16.msra.mxu0 0
  %677 = vmatprep.subr.bf16.mxu0 0
  %678 = vmatpush1.bf16.msra.mxu0 0
  %679 = vmatprep.subr.bf16.mxu0 0
  %680 = vmatpush1.bf16.msra.mxu0 0
  %681 = vmatprep.subr.bf16.mxu0 0
  %682 = vmatpush1.bf16.msra.mxu0 0
  %683 = vmatprep.mubr.bf16.mxu0 0
  %684 = vmatmul.mubr.bf16.gmra.mrb[0].mxu0 %v649
  %v685 = vpop.f32.mrb[0].mxu0
  %v686 = vadd.f32 %v636, %v685
  %v687 = vpop.f32.mrb[0].mxu0
  %v688 = vpop.f32.mrb[0].mxu0
  %v689 = vadd.f32 %v639, %v688
  %v690 = vpop.f32.mrb[0].mxu0
  %691 = vdwg.mxu0
  %v692 = vadd.f32 %v39, %v686
  %v693 = vadd.f32 %v40, %v689
  %v694 = vld [vmem:[%s4] sm:$0x1]
  %v695 = vmul.f32 %v692, %v692
  %v696 = vmul.f32 %v693, %v693
  %v697 = vsel %vm44, %v695, 0.0
  %698 = vadd.xlane.f32.xlu0 %v697
  %v699 = vpop.xlane.xlu0 %698
  %v700 = vsel %vm44, %v696, 0.0
  %701 = vadd.xlane.f32.xlu0 %v700
  %v702 = vpop.xlane.xlu0 %701
  %v703 = vmul.f32 %v699, %v51
  %v704 = vmul.f32 %v702, %v51
  %v705 = vadd.f32 %v703, 1e-05
  %v706 = vadd.f32 %v704, 1e-05
  %v707 = vrsqrt.pop %v705
  %v708 = vrsqrt.pop %v706
  %v709 = vmul.f32 %v692, %v707
  %v710 = vmul.f32 %v693, %v708
  %v712 = vlaneseq
  %v713 = vshrl.u32 %v712, 7
  %v714 = vsub.s32 0, %v713
  %v715 = vrot.slane %v694, %v714
  %v717 = vmul.f32 %v709, %v715
  %v718 = vmul.f32 %v710, %v715
  %v719 = vpack.c.bf16 %v718, %v717
  %v720 = vld [vmem:[%s5] sm:$0xf]
  %v721 = vld [vmem:[%s5 + $0x4] sm:$0xf]
  %v722 = vld [vmem:[%s5 + $0x8] sm:$0xf]
  %v723 = vld [vmem:[%s5 + $0xc] sm:$0xf]
  %v728 = vunpack.c.l.b16 %v720
  %v729 = vunpack.c.l.b16 %v721
  %v730 = vunpack.c.l.b16 %v722
  %v731 = vunpack.c.l.b16 %v723
  %v732 = vpack.c.b16 %v729, %v728
  %v733 = vpack.c.b16 %v731, %v730
  %v737 = vsel %vm44, %v719, 0
  %739 = vmatprep.subr.bf16.mxu0 0
  %740 = vmatpush1.bf16.msra.mxu0 %v732
  %741 = vmatprep.subr.bf16.mxu0 0
  %742 = vmatpush1.bf16.msra.mxu0 %v733
  %743 = vmatprep.subr.bf16.mxu0 0
  %744 = vmatpush1.bf16.msra.mxu0 0
  %745 = vmatprep.subr.bf16.mxu0 0
  %746 = vmatpush1.bf16.msra.mxu0 0
  %747 = vmatprep.subr.bf16.mxu0 0
  %748 = vmatpush1.bf16.msra.mxu0 0
  %749 = vmatprep.subr.bf16.mxu0 0
  %750 = vmatpush1.bf16.msra.mxu0 0
  %751 = vmatprep.subr.bf16.mxu0 0
  %752 = vmatpush1.bf16.msra.mxu0 0
  %753 = vmatprep.subr.bf16.mxu0 0
  %754 = vmatpush1.bf16.msra.mxu0 0
  %755 = vmatprep.subr.bf16.mxu0 0
  %756 = vmatpush1.bf16.msra.mxu0 0
  %757 = vmatprep.subr.bf16.mxu0 0
  %758 = vmatpush1.bf16.msra.mxu0 0
  %759 = vmatprep.subr.bf16.mxu0 0
  %760 = vmatpush1.bf16.msra.mxu0 0
  %761 = vmatprep.subr.bf16.mxu0 0
  %762 = vmatpush1.bf16.msra.mxu0 0
  %763 = vmatprep.subr.bf16.mxu0 0
  %764 = vmatpush1.bf16.msra.mxu0 0
  %765 = vmatprep.subr.bf16.mxu0 0
  %766 = vmatpush1.bf16.msra.mxu0 0
  %767 = vmatprep.subr.bf16.mxu0 0
  %768 = vmatpush1.bf16.msra.mxu0 0
  %769 = vmatprep.subr.bf16.mxu0 0
  %770 = vmatpush1.bf16.msra.mxu0 0
  %771 = vmatprep.mubr.bf16.mxu0 0
  %772 = vmatmul.mubr.bf16.gmra.mrb[0].mxu0 %v737
  %v773 = vpop.f32.mrb[0].mxu0
  %v774 = vadd.f32 0.0, %v773
  %v775 = vpop.f32.mrb[0].mxu0
  %v776 = vpop.f32.mrb[0].mxu0
  %v777 = vadd.f32 0.0, %v776
  %v778 = vpop.f32.mrb[0].mxu0
  %779 = vdwg.mxu0
  %v780 = vsub.f32 0.0, %v774
  %v781 = vsub.f32 0.0, %v777
  %v782 = vmul.f32 %v780, 1.442695
  %v783 = vpow.pop %v782
  %v784 = vmul.f32 %v781, 1.442695
  %v785 = vpow.pop %v784
  %v786 = vadd.f32 %v783, 1.0
  %v787 = vadd.f32 %v785, 1.0
  %v788 = vrcp.pop %v786
  %v789 = vmul.f32 1.0, %v788
  %v790 = vrcp.pop %v787
  %v791 = vmul.f32 1.0, %v790
  %v792 = vmul.f32 %v774, %v789
  %v793 = vmul.f32 %v777, %v791
  %796 = vrot.lane.b32.xlu0 %v774, 64
  %v797 = vpop.permute.xlu0 %796
  %798 = vrot.lane.b32.xlu0 %v777, 64
  %v799 = vpop.permute.xlu0 %798
  %v802 = vmul.f32 %v792, %v797
  %v803 = vmul.f32 %v793, %v799
  %v804 = vpack.c.bf16 %v803, %v802
  %v805 = vld [vmem:[%s6] sm:$0xf]
  %v806 = vld [vmem:[%s6 + $0x4] sm:$0xf]
  %v807 = vld [vmem:[%s6 + $0x8] sm:$0xf]
  %v808 = vld [vmem:[%s6 + $0xc] sm:$0xf]
  %v809 = vld [vmem:[%s6 + $0x10] sm:$0xf]
  %v810 = vld [vmem:[%s6 + $0x14] sm:$0xf]
  %v811 = vld [vmem:[%s6 + $0x18] sm:$0xf]
  %v812 = vld [vmem:[%s6 + $0x1c] sm:$0xf]
  %v821 = vunpack.c.l.b16 %v805
  %v822 = vunpack.c.l.b16 %v806
  %v823 = vunpack.c.l.b16 %v807
  %v824 = vunpack.c.l.b16 %v808
  %v825 = vunpack.c.l.b16 %v809
  %v826 = vunpack.c.l.b16 %v810
  %v827 = vunpack.c.l.b16 %v811
  %v828 = vunpack.c.l.b16 %v812
  %v829 = vpack.c.b16 %v822, %v821
  %v830 = vpack.c.b16 %v824, %v823
  %v831 = vpack.c.b16 %v826, %v825
  %v832 = vpack.c.b16 %v828, %v827
  %vm837 = vcmask 523264
  %v839 = vsel %vm837, %v804, 0
  %841 = vmatprep.subr.bf16.mxu0 0
  %842 = vmatpush1.bf16.msra.mxu0 %v829
  %843 = vmatprep.subr.bf16.mxu0 0
  %844 = vmatpush1.bf16.msra.mxu0 %v830
  %845 = vmatprep.subr.bf16.mxu0 0
  %846 = vmatpush1.bf16.msra.mxu0 %v831
  %847 = vmatprep.subr.bf16.mxu0 0
  %848 = vmatpush1.bf16.msra.mxu0 %v832
  %849 = vmatprep.subr.bf16.mxu0 0
  %850 = vmatpush1.bf16.msra.mxu0 0
  %851 = vmatprep.subr.bf16.mxu0 0
  %852 = vmatpush1.bf16.msra.mxu0 0
  %853 = vmatprep.subr.bf16.mxu0 0
  %854 = vmatpush1.bf16.msra.mxu0 0
  %855 = vmatprep.subr.bf16.mxu0 0
  %856 = vmatpush1.bf16.msra.mxu0 0
  %857 = vmatprep.subr.bf16.mxu0 0
  %858 = vmatpush1.bf16.msra.mxu0 0
  %859 = vmatprep.subr.bf16.mxu0 0
  %860 = vmatpush1.bf16.msra.mxu0 0
  %861 = vmatprep.subr.bf16.mxu0 0
  %862 = vmatpush1.bf16.msra.mxu0 0
  %863 = vmatprep.subr.bf16.mxu0 0
  %864 = vmatpush1.bf16.msra.mxu0 0
  %865 = vmatprep.subr.bf16.mxu0 0
  %866 = vmatpush1.bf16.msra.mxu0 0
  %867 = vmatprep.subr.bf16.mxu0 0
  %868 = vmatpush1.bf16.msra.mxu0 0
  %869 = vmatprep.subr.bf16.mxu0 0
  %870 = vmatpush1.bf16.msra.mxu0 0
  %871 = vmatprep.subr.bf16.mxu0 0
  %872 = vmatpush1.bf16.msra.mxu0 0
  %873 = vmatprep.mubr.bf16.mxu0 0
  %874 = vmatmul.mubr.bf16.gmra.mrb[0].mxu0 %v839
  %v875 = vpop.f32.mrb[0].mxu0
  %v876 = vadd.f32 0.0, %v875
  %v877 = vpop.f32.mrb[0].mxu0
  %v878 = vpop.f32.mrb[0].mxu0
  %v879 = vadd.f32 0.0, %v878
  %v880 = vpop.f32.mrb[0].mxu0
  %881 = vdwg.mxu0
  %v882 = vadd.f32 %v692, %v876
  %v883 = vadd.f32 %v693, %v879
  %884 = vst.msk [vmem:[%s11] sm:$0xff] %vm44, %v882
  %885 = vst.msk [vmem:[%s11 + $0x8] sm:$0xff] %vm44, %v883
  // Predicated region
  $region46: #{llm_backbone_forward.3} parent=0 // pred_check
    _
  $region47: #{llm_backbone_forward.3} parent=0 // pred_check_branch
    %887 = sbr.rel (0) target = $region49
  $region48: #{llm_backbone_forward.3} parent=0 // pred_region
    _
  $region49: #{llm_backbone_forward.3} parent=0 // pred_fallthru
    _
  // Predicated region
  $region50: #{llm_backbone_forward.3} parent=0 // pred_check
    _
  $region51: #{llm_backbone_forward.3} parent=0 // pred_check_branch
    %889 = sbr.rel (0) target = $region53
  $region52: #{llm_backbone_forward.3} parent=0 // pred_region
    _
  $region53: #{llm_backbone_forward.3} parent=0 // pred_fallthru
    _

</llo_original>
